<compile_context>
chip_gen: v6e
topology: v6e:2x2x1
jax: 0.10.0
libtpu: 0.0.40
codegen_flags: <defaults>
</compile_context>

<pallas_src>
import functools
import math

import jax
import jax.numpy as jnp
from jax import lax
from jax.experimental import pallas as pl
from jax.experimental.pallas import tpu as pltpu


def _round_up(n, m):
    return ((n + m - 1) // m) * m


def plan_tiles(n_nodes, max_tile=512):
    """Pad node count to a multiple of 128 and pick a tile (<= max_tile) that divides it."""
    n_pad = _round_up(n_nodes, 128)
    tile = max(128, min((max_tile // 128) * 128, n_pad))
    while n_pad % tile:
        tile -= 128
    return n_pad, tile


def prepare_adjacency(adj, n_pad):
    """Binarize (edge existence only matters), cast to bf16 (0/1 exact) and zero-pad.

    Hoisted out of the per-call forward so a static graph is preprocessed exactly once.
    """
    n = adj.shape[0]
    a = (adj != 0).astype(jnp.bfloat16)
    return jnp.pad(a, ((0, n_pad - n), (0, n_pad - n)))


# ---------------------------------------------------------------------------
# Projection kernel:  S^T tile = W^T @ X^T tile   (blocked transposed bf16 output)
# ---------------------------------------------------------------------------
def _project_kernel(xt_ref, wt_ref, o_ref):
    o_ref[0] = lax.dot_general(
        wt_ref[...], xt_ref[...],
        dimension_numbers=(((1,), (0,)), ((), ())),
        preferred_element_type=jnp.float32,
    ).astype(o_ref.dtype)


def project_pallas(xt, wt, *, tile):
    fin, n_pad = xt.shape
    fout = wt.shape[0]
    nb = n_pad // tile
    return pl.pallas_call(
        _project_kernel,
        out_shape=jax.ShapeDtypeStruct((nb, fout, tile), jnp.bfloat16),
        grid_spec=pltpu.PrefetchScalarGridSpec(
            num_scalar_prefetch=0,
            grid=(nb,),
            in_specs=[
                pl.BlockSpec((fin, tile), lambda i: (0, i)),    # X^T column tile
                pl.BlockSpec((fout, fin), lambda i: (0, 0)),    # W^T resident
            ],
            out_specs=pl.BlockSpec((1, fout, tile), lambda i: (i, 0, 0)),
        ),
        compiler_params=pltpu.CompilerParams(dimension_semantics=("parallel",)),
    )(xt, wt)


# ---------------------------------------------------------------------------
# Aggregation kernels.
#   acc (fout, ti) accumulates   S^T[:, k-block] @ A[k-block, i-block]   over k,
#   seeded with the self term S^T[:, i-block]; writeback fuses bias+ReLU (layer 1)
#   or bias + the W2 projection (layer 2).
# ---------------------------------------------------------------------------
def _accumulate_step(adj_ref, s_ref, acc_ref):
    i = pl.program_id(0)
    k = pl.program_id(1)

    @pl.when(k == 0)
    def _init():
        acc_ref[...] = s_ref[i].astype(jnp.float32)        # self term seeds the accumulator

    # bf16 x bf16 MXU matmul with f32 accumulation (no explicit upcasts).
    acc_ref[...] += lax.dot_general(
        s_ref[k], adj_ref[...],
        dimension_numbers=(((1,), (0,)), ((), ())),
        preferred_element_type=jnp.float32,
    )


def _agg_relu_kernel(adj_ref, s_ref, b_ref, o_ref, acc_ref):
    _accumulate_step(adj_ref, s_ref, acc_ref)

    @pl.when(pl.program_id(1) == pl.num_programs(1) - 1)
    def _finish():
        o_ref[0] = jnp.maximum(acc_ref[...] + b_ref[...], 0.0).astype(o_ref.dtype)


def _agg_proj_kernel(adj_ref, s_ref, wt_ref, b_ref, o_ref, acc_ref):
    _accumulate_step(adj_ref, s_ref, acc_ref)

    @pl.when(pl.program_id(1) == pl.num_programs(1) - 1)
    def _finish():
        out = lax.dot_general(
            wt_ref[...], acc_ref[...],
            dimension_numbers=(((1,), (0,)), ((), ())),
            preferred_element_type=jnp.float32,
        )
        o_ref[0] = (out + b_ref[...]).astype(o_ref.dtype)


def aggregate_relu_pallas(adj_b, s_blocked, bias, *, tile):
    nb, fout, _ = s_blocked.shape
    return pl.pallas_call(
        _agg_relu_kernel,
        out_shape=jax.ShapeDtypeStruct((nb, fout, tile), jnp.bfloat16),
        grid_spec=pltpu.PrefetchScalarGridSpec(
            num_scalar_prefetch=0,
            grid=(nb, nb),
            in_specs=[
                pl.BlockSpec((tile, tile), lambda i, k: (k, i)),         # A[k-block, i-block]
                pl.BlockSpec((nb, fout, tile), lambda i, k: (0, 0, 0)),  # resident S^T (bf16)
                pl.BlockSpec((fout, 1), lambda i, k: (0, 0)),            # bias
            ],
            out_specs=pl.BlockSpec((1, fout, tile), lambda i, k: (i, 0, 0)),
            scratch_shapes=[pltpu.VMEM((fout, tile), jnp.float32)],
        ),
        compiler_params=pltpu.CompilerParams(
            dimension_semantics=("parallel", "arbitrary"),
            vmem_limit_bytes=48 * 1024 * 1024,   # headroom on v7x (64 MiB physical)
        ),
    )(adj_b, s_blocked, bias)


def aggregate_project_pallas(adj_b, s_blocked, wt, bias, *, tile):
    nb, fin, _ = s_blocked.shape
    fout = wt.shape[0]
    return pl.pallas_call(
        _agg_proj_kernel,
        out_shape=jax.ShapeDtypeStruct((nb, fout, tile), jnp.float32),
        grid_spec=pltpu.PrefetchScalarGridSpec(
            num_scalar_prefetch=0,
            grid=(nb, nb),
            in_specs=[
                pl.BlockSpec((tile, tile), lambda i, k: (k, i)),
                pl.BlockSpec((nb, fin, tile), lambda i, k: (0, 0, 0)),   # resident h^T (bf16)
                pl.BlockSpec((fout, fin), lambda i, k: (0, 0)),          # W2^T resident
                pl.BlockSpec((fout, 1), lambda i, k: (0, 0)),            # b2
            ],
            out_specs=pl.BlockSpec((1, fout, tile), lambda i, k: (i, 0, 0)),
            scratch_shapes=[pltpu.VMEM((fin, tile), jnp.float32)],
        ),
        compiler_params=pltpu.CompilerParams(
            dimension_semantics=("parallel", "arbitrary"),
            vmem_limit_bytes=48 * 1024 * 1024,
        ),
    )(adj_b, s_blocked, wt, bias)


# ---------------------------------------------------------------------------
# Model
# ---------------------------------------------------------------------------
def init_params(key, nfeat, nhid, nclass, dtype=jnp.float32):
    """uniform(-stdv, stdv), stdv = 1/sqrt(out_features) — mirrors reset_parameters."""
    k1, k2, k3, k4 = jax.random.split(key, 4)
    s1 = 1.0 / math.sqrt(nhid)
    s2 = 1.0 / math.sqrt(nclass)
    return {
        "w1": jax.random.uniform(k1, (nfeat, nhid), dtype, minval=-s1, maxval=s1),
        "b1": jax.random.uniform(k2, (nhid,), dtype, minval=-s1, maxval=s1),
        "w2": jax.random.uniform(k3, (nhid, nclass), dtype, minval=-s2, maxval=s2),
        "b2": jax.random.uniform(k4, (nclass,), dtype, minval=-s2, maxval=s2),
    }


@functools.partial(jax.jit, static_argnames=("tile",))
def graphsage_forward(x, adj_b, params, *, tile=512):
    """x: (N, nfeat) f32; adj_b: (n_pad, n_pad) bf16 0/1 adjacency from prepare_adjacency."""
    n, _ = x.shape
    n_pad = adj_b.shape[0]
    nhid = params["w1"].shape[1]
    nclass = params["w2"].shape[1]

    # Cheap one-off layout plumbing (small vs. the N^2 aggregation): transposed/padded features
    # and transposed weights so every kernel matmul is a canonical (M,K)x(K,N) contraction.
    xt = jnp.pad(x, ((0, n_pad - n), (0, 0))).T            # (nfeat, n_pad) f32
    w1t = params["w1"].T.astype(jnp.float32)               # (nhid, nfeat)
    w2t = params["w2"].T.astype(jnp.float32)               # (nclass, nhid)
    b1 = params["b1"].astype(jnp.float32).reshape(nhid, 1)
    b2 = params["b2"].astype(jnp.float32).reshape(nclass, 1)

    # Layer 1: project once, then tiled aggregation (bias + ReLU fused into the writeback).
    s1 = project_pallas(xt, w1t, tile=tile)                    # (nb, nhid, tile) bf16
    h = aggregate_relu_pallas(adj_b, s1, b1, tile=tile)        # (nb, nhid, tile) bf16

    # Dropout: inference mode -> identity.
    # TODO(synk): training-mode dropout (pltpu PRNG) not implemented.

    # Layer 2 reordered (exact algebra): out = (A^T h + h) @ W2 + b2 — the N^2 matmul stays on
    # the wide nhid tensor and the W2 projection + b2 is fused into the final-k writeback.
    out_t = aggregate_project_pallas(adj_b, h, w2t, b2, tile=tile)   # (nb, nclass, tile) f32

    out = out_t.transpose(0, 2, 1).reshape(n_pad, nclass)[:n]
    return out


def graphsage_reference(x, adj, params):
    """Plain-JAX f32 reference of the PyTorch semantics (for correctness check)."""
    a = (adj != 0).astype(jnp.float32)

    def layer(inp, w, b):
        support = inp @ w
        agg = a.T @ support          # agg.index_add_(0, col, support[row])
        return agg + support + b     # += support ; += bias

    h = jnp.maximum(layer(x, params["w1"], params["b1"]), 0.0)
    return layer(h, params["w2"], params["b2"])


if __name__ == "__main__":
    N, nfeat, nhid, nclass = 256, 32, 64, 16

    key = jax.random.PRNGKey(0)
    kx, kadj, kp = jax.random.split(key, 3)

    x = jax.random.normal(kx, (N, nfeat), dtype=jnp.float32)
    # Random sparse directed graph (~5% density), given as a dense matrix like the dense ref.
    adj = (jax.random.uniform(kadj, (N, N)) < 0.05).astype(jnp.float32)
    params = init_params(kp, nfeat, nhid, nclass)

    # tile=128 here only so this tiny N=256 demo exercises a (2, 2) row/reduction grid and the
    # accumulator init/finish path; the production default tile is 512.
    n_pad, tile = plan_tiles(N, max_tile=128)
    adj_b = prepare_adjacency(adj, n_pad)     # binarize + bf16 + pad, hoisted out of forward

    out = graphsage_forward(x, adj_b, params, tile=tile)
    out = jax.block_until_ready(out)

    ref = graphsage_reference(x, adj, params)
    assert out.shape == (N, nclass)
    # Tolerance accounts for bf16 MXU operands (support/h) vs. the pure-f32 reference.
    assert jnp.allclose(out, ref, atol=5e-2, rtol=2e-2), "mismatch vs reference"

    print("KERNEL_OK")
</pallas_src>

<mosaic_0001>
module attributes {stable_mosaic.version = 11 : i64} {
  func.func @_project_kernel(%arg0: i32, %arg1: memref<32x128xf32, #tpu.memory_space<vmem>>, %arg2: memref<64x32xf32, #tpu.memory_space<vmem>>, %arg3: memref<1x64x128xbf16, #tpu.memory_space<vmem>>) attributes {dimension_semantics = [#tpu.dimension_semantics<parallel>], iteration_bounds = array<i64: 2>, scalar_prefetch = 0 : i64, scratch_operands = 0 : i64, tpu.core_type = #tpu.core_type<tc>, window_params = [{transform_indices = @transform_0, window_bounds = array<i64: 32, 128>}, {pipeline_mode = #tpu.pipeline_mode<synchronous>, transform_indices = @transform_1, window_bounds = array<i64: 64, 32>}, {transform_indices = @transform_2, window_bounds = array<i64: 1, 64, 128>}]} {
    %c0 = arith.constant 0 : index
    %c0_0 = arith.constant 0 : index
    %0 = vector.load %arg2[%c0, %c0_0] : memref<64x32xf32, #tpu.memory_space<vmem>>, vector<64x32xf32>
    %c0_1 = arith.constant 0 : index
    %c0_2 = arith.constant 0 : index
    %1 = vector.load %arg1[%c0_1, %c0_2] : memref<32x128xf32, #tpu.memory_space<vmem>>, vector<32x128xf32>
    %cst = arith.constant dense<0.000000e+00> : vector<64x128xf32>
    %2 = tpu.matmul %0, %1, %cst {dimension_numbers = #tpu.dot_dimension_numbers<[1], [0], [0], [1], [0, 0, 1, 1], [], []>} : vector<64x32xf32>, vector<32x128xf32>, vector<64x128xf32> -> vector<64x128xf32>
    %3 = arith.truncf %2 : vector<64x128xf32> to vector<64x128xbf16>
    %c0_3 = arith.constant 0 : index
    %c0_4 = arith.constant 0 : index
    %c0_5 = arith.constant 0 : index
    %4 = vector.load %arg3[%c0_3, %c0_4, %c0_5] : memref<1x64x128xbf16, #tpu.memory_space<vmem>>, vector<1x64x128xbf16>
    %5 = vector.shape_cast %4 : vector<1x64x128xbf16> to vector<64x128xbf16>
    %6 = vector.shape_cast %3 : vector<64x128xbf16> to vector<1x64x128xbf16>
    tpu.vector_store %arg3[%c0_3, %c0_4, %c0_5], %6 {strides = array<i32>} : memref<1x64x128xbf16, #tpu.memory_space<vmem>>, vector<1x64x128xbf16>,
    return
  }
  func.func @transform_0(%arg0: i32) -> (i32, i32) {
    %c0_i32 = arith.constant 0 : i32
    %c0_i32_0 = arith.constant 0 : i32
    return %c0_i32, %arg0 : i32, i32
  }
  func.func @transform_1(%arg0: i32) -> (i32, i32) {
    %c0_i32 = arith.constant 0 : i32
    %c0_i32_0 = arith.constant 0 : i32
    %c0_i32_1 = arith.constant 0 : i32
    return %c0_i32, %c0_i32_0 : i32, i32
  }
  func.func @transform_2(%arg0: i32) -> (i32, i32, i32) {
    %c0_i32 = arith.constant 0 : i32
    %c0_i32_0 = arith.constant 0 : i32
    %c0_i32_1 = arith.constant 0 : i32
    return %arg0, %c0_i32, %c0_i32_0 : i32, i32, i32
  }
}

module attributes {stable_mosaic.version = 11 : i64} {
  func.func @_agg_relu_kernel(%arg0: i32, %arg1: i32, %arg2: memref<128x128xbf16, #tpu.memory_space<vmem>>, %arg3: memref<2x64x128xbf16, #tpu.memory_space<vmem>>, %arg4: memref<64x1xf32, #tpu.memory_space<vmem>>, %arg5: memref<1x64x128xbf16, #tpu.memory_space<vmem>>, %arg6: memref<64x128xf32, #tpu.memory_space<vmem>>) attributes {dimension_semantics = [#tpu.dimension_semantics<parallel>, #tpu.dimension_semantics<arbitrary>], iteration_bounds = array<i64: 2, 2>, scalar_prefetch = 0 : i64, scratch_operands = 1 : i64, tpu.core_type = #tpu.core_type<tc>, window_params = [{transform_indices = @transform_0, window_bounds = array<i64: 128, 128>}, {pipeline_mode = #tpu.pipeline_mode<synchronous>, transform_indices = @transform_1, window_bounds = array<i64: 2, 64, 128>}, {pipeline_mode = #tpu.pipeline_mode<synchronous>, transform_indices = @transform_2, window_bounds = array<i64: 64, 1>}, {transform_indices = @transform_3, window_bounds = array<i64: 1, 64, 128>}]} {
    %c0_i32 = arith.constant 0 : i32
    %0 = arith.cmpi eq, %arg1, %c0_i32 : i32
    %1 = arith.extui %0 : i1 to i32
    %c0_i32_0 = arith.constant 0 : i32
    %2 = arith.cmpi ne, %1, %c0_i32_0 : i32
    scf.if %2 {
      %14 = arith.index_cast %arg0 : i32 to index
      %c0_9 = arith.constant 0 : index
      %c0_10 = arith.constant 0 : index
      %15 = vector.load %arg3[%14, %c0_9, %c0_10] : memref<2x64x128xbf16, #tpu.memory_space<vmem>>, vector<1x64x128xbf16>
      %16 = vector.shape_cast %15 : vector<1x64x128xbf16> to vector<64x128xbf16>
      %17 = arith.extf %16 : vector<64x128xbf16> to vector<64x128xf32>
      %c0_11 = arith.constant 0 : index
      %c0_12 = arith.constant 0 : index
      %18 = vector.load %arg6[%c0_11, %c0_12] : memref<64x128xf32, #tpu.memory_space<vmem>>, vector<64x128xf32>
      tpu.vector_store %arg6[%c0_11, %c0_12], %17 {strides = array<i32>} : memref<64x128xf32, #tpu.memory_space<vmem>>, vector<64x128xf32>,
    } else {
    }
    %c0 = arith.constant 0 : index
    %c0_1 = arith.constant 0 : index
    %3 = vector.load %arg6[%c0, %c0_1] : memref<64x128xf32, #tpu.memory_space<vmem>>, vector<64x128xf32>
    %4 = arith.index_cast %arg1 : i32 to index
    %c0_2 = arith.constant 0 : index
    %c0_3 = arith.constant 0 : index
    %5 = vector.load %arg3[%4, %c0_2, %c0_3] : memref<2x64x128xbf16, #tpu.memory_space<vmem>>, vector<1x64x128xbf16>
    %6 = vector.shape_cast %5 : vector<1x64x128xbf16> to vector<64x128xbf16>
    %c0_4 = arith.constant 0 : index
    %c0_5 = arith.constant 0 : index
    %7 = vector.load %arg2[%c0_4, %c0_5] : memref<128x128xbf16, #tpu.memory_space<vmem>>, vector<128x128xbf16>
    %cst = arith.constant dense<0.000000e+00> : vector<64x128xf32>
    %8 = tpu.matmul %6, %7, %cst {dimension_numbers = #tpu.dot_dimension_numbers<[1], [0], [0], [1], [0, 0, 1, 1], [], []>} : vector<64x128xbf16>, vector<128x128xbf16>, vector<64x128xf32> -> vector<64x128xf32>
    %9 = arith.addf %3, %8 : vector<64x128xf32>
    %c0_6 = arith.constant 0 : index
    %c0_7 = arith.constant 0 : index
    %10 = vector.load %arg6[%c0_6, %c0_7] : memref<64x128xf32, #tpu.memory_space<vmem>>, vector<64x128xf32>
    tpu.vector_store %arg6[%c0_6, %c0_7], %9 {strides = array<i32>} : memref<64x128xf32, #tpu.memory_space<vmem>>, vector<64x128xf32>,
    %c1_i32 = arith.constant 1 : i32
    %11 = arith.cmpi eq, %arg1, %c1_i32 : i32
    %12 = arith.extui %11 : i1 to i32
    %c0_i32_8 = arith.constant 0 : i32
    %13 = arith.cmpi ne, %12, %c0_i32_8 : i32
    scf.if %13 {
      %c0_9 = arith.constant 0 : index
      %c0_10 = arith.constant 0 : index
      %14 = vector.load %arg6[%c0_9, %c0_10] : memref<64x128xf32, #tpu.memory_space<vmem>>, vector<64x128xf32>
      %c0_11 = arith.constant 0 : index
      %c0_12 = arith.constant 0 : index
      %15 = vector.load %arg4[%c0_11, %c0_12] : memref<64x1xf32, #tpu.memory_space<vmem>>, vector<64x1xf32>
      %16 = vector.broadcast %15 : vector<64x1xf32> to vector<64x128xf32>
      %17 = arith.addf %14, %16 : vector<64x128xf32>
      %cst_13 = arith.constant 0.000000e+00 : f32
      %18 = vector.broadcast %cst_13 : f32 to vector<64x128xf32>
      %19 = arith.maximumf %17, %18 : vector<64x128xf32>
      %20 = arith.truncf %19 : vector<64x128xf32> to vector<64x128xbf16>
      %c0_14 = arith.constant 0 : index
      %c0_15 = arith.constant 0 : index
      %c0_16 = arith.constant 0 : index
      %21 = vector.load %arg5[%c0_14, %c0_15, %c0_16] : memref<1x64x128xbf16, #tpu.memory_space<vmem>>, vector<1x64x128xbf16>
      %22 = vector.shape_cast %21 : vector<1x64x128xbf16> to vector<64x128xbf16>
      %23 = vector.shape_cast %20 : vector<64x128xbf16> to vector<1x64x128xbf16>
      tpu.vector_store %arg5[%c0_14, %c0_15, %c0_16], %23 {strides = array<i32>} : memref<1x64x128xbf16, #tpu.memory_space<vmem>>, vector<1x64x128xbf16>,
    } else {
    }
    return
  }
  func.func @transform_0(%arg0: i32, %arg1: i32) -> (i32, i32) {
    %c0_i32 = arith.constant 0 : i32
    return %arg1, %arg0 : i32, i32
  }
  func.func @transform_1(%arg0: i32, %arg1: i32) -> (i32, i32, i32) {
    %c0_i32 = arith.constant 0 : i32
    %c0_i32_0 = arith.constant 0 : i32
    %c0_i32_1 = arith.constant 0 : i32
    %c0_i32_2 = arith.constant 0 : i32
    return %c0_i32, %c0_i32_0, %c0_i32_1 : i32, i32, i32
  }
  func.func @transform_2(%arg0: i32, %arg1: i32) -> (i32, i32) {
    %c0_i32 = arith.constant 0 : i32
    %c0_i32_0 = arith.constant 0 : i32
    %c0_i32_1 = arith.constant 0 : i32
    return %c0_i32, %c0_i32_0 : i32, i32
  }
  func.func @transform_3(%arg0: i32, %arg1: i32) -> (i32, i32, i32) {
    %c0_i32 = arith.constant 0 : i32
    %c0_i32_0 = arith.constant 0 : i32
    %c0_i32_1 = arith.constant 0 : i32
    return %arg0, %c0_i32, %c0_i32_0 : i32, i32, i32
  }
}

module attributes {stable_mosaic.version = 11 : i64} {
  func.func @_agg_proj_kernel(%arg0: i32, %arg1: i32, %arg2: memref<128x128xbf16, #tpu.memory_space<vmem>>, %arg3: memref<2x64x128xbf16, #tpu.memory_space<vmem>>, %arg4: memref<16x64xf32, #tpu.memory_space<vmem>>, %arg5: memref<16x1xf32, #tpu.memory_space<vmem>>, %arg6: memref<1x16x128xf32, #tpu.memory_space<vmem>>, %arg7: memref<64x128xf32, #tpu.memory_space<vmem>>) attributes {dimension_semantics = [#tpu.dimension_semantics<parallel>, #tpu.dimension_semantics<arbitrary>], iteration_bounds = array<i64: 2, 2>, scalar_prefetch = 0 : i64, scratch_operands = 1 : i64, tpu.core_type = #tpu.core_type<tc>, window_params = [{transform_indices = @transform_0, window_bounds = array<i64: 128, 128>}, {pipeline_mode = #tpu.pipeline_mode<synchronous>, transform_indices = @transform_1, window_bounds = array<i64: 2, 64, 128>}, {pipeline_mode = #tpu.pipeline_mode<synchronous>, transform_indices = @transform_2, window_bounds = array<i64: 16, 64>}, {pipeline_mode = #tpu.pipeline_mode<synchronous>, transform_indices = @transform_3, window_bounds = array<i64: 16, 1>}, {transform_indices = @transform_4, window_bounds = array<i64: 1, 16, 128>}]} {
    %c0_i32 = arith.constant 0 : i32
    %0 = arith.cmpi eq, %arg1, %c0_i32 : i32
    %1 = arith.extui %0 : i1 to i32
    %c0_i32_0 = arith.constant 0 : i32
    %2 = arith.cmpi ne, %1, %c0_i32_0 : i32
    scf.if %2 {
      %14 = arith.index_cast %arg0 : i32 to index
      %c0_9 = arith.constant 0 : index
      %c0_10 = arith.constant 0 : index
      %15 = vector.load %arg3[%14, %c0_9, %c0_10] : memref<2x64x128xbf16, #tpu.memory_space<vmem>>, vector<1x64x128xbf16>
      %16 = vector.shape_cast %15 : vector<1x64x128xbf16> to vector<64x128xbf16>
      %17 = arith.extf %16 : vector<64x128xbf16> to vector<64x128xf32>
      %c0_11 = arith.constant 0 : index
      %c0_12 = arith.constant 0 : index
      %18 = vector.load %arg7[%c0_11, %c0_12] : memref<64x128xf32, #tpu.memory_space<vmem>>, vector<64x128xf32>
      tpu.vector_store %arg7[%c0_11, %c0_12], %17 {strides = array<i32>} : memref<64x128xf32, #tpu.memory_space<vmem>>, vector<64x128xf32>,
    } else {
    }
    %c0 = arith.constant 0 : index
    %c0_1 = arith.constant 0 : index
    %3 = vector.load %arg7[%c0, %c0_1] : memref<64x128xf32, #tpu.memory_space<vmem>>, vector<64x128xf32>
    %4 = arith.index_cast %arg1 : i32 to index
    %c0_2 = arith.constant 0 : index
    %c0_3 = arith.constant 0 : index
    %5 = vector.load %arg3[%4, %c0_2, %c0_3] : memref<2x64x128xbf16, #tpu.memory_space<vmem>>, vector<1x64x128xbf16>
    %6 = vector.shape_cast %5 : vector<1x64x128xbf16> to vector<64x128xbf16>
    %c0_4 = arith.constant 0 : index
    %c0_5 = arith.constant 0 : index
    %7 = vector.load %arg2[%c0_4, %c0_5] : memref<128x128xbf16, #tpu.memory_space<vmem>>, vector<128x128xbf16>
    %cst = arith.constant dense<0.000000e+00> : vector<64x128xf32>
    %8 = tpu.matmul %6, %7, %cst {dimension_numbers = #tpu.dot_dimension_numbers<[1], [0], [0], [1], [0, 0, 1, 1], [], []>} : vector<64x128xbf16>, vector<128x128xbf16>, vector<64x128xf32> -> vector<64x128xf32>
    %9 = arith.addf %3, %8 : vector<64x128xf32>
    %c0_6 = arith.constant 0 : index
    %c0_7 = arith.constant 0 : index
    %10 = vector.load %arg7[%c0_6, %c0_7] : memref<64x128xf32, #tpu.memory_space<vmem>>, vector<64x128xf32>
    tpu.vector_store %arg7[%c0_6, %c0_7], %9 {strides = array<i32>} : memref<64x128xf32, #tpu.memory_space<vmem>>, vector<64x128xf32>,
    %c1_i32 = arith.constant 1 : i32
    %11 = arith.cmpi eq, %arg1, %c1_i32 : i32
    %12 = arith.extui %11 : i1 to i32
    %c0_i32_8 = arith.constant 0 : i32
    %13 = arith.cmpi ne, %12, %c0_i32_8 : i32
    scf.if %13 {
      %c0_9 = arith.constant 0 : index
      %c0_10 = arith.constant 0 : index
      %14 = vector.load %arg4[%c0_9, %c0_10] : memref<16x64xf32, #tpu.memory_space<vmem>>, vector<16x64xf32>
      %c0_11 = arith.constant 0 : index
      %c0_12 = arith.constant 0 : index
      %15 = vector.load %arg7[%c0_11, %c0_12] : memref<64x128xf32, #tpu.memory_space<vmem>>, vector<64x128xf32>
      %cst_13 = arith.constant dense<0.000000e+00> : vector<16x128xf32>
      %16 = tpu.matmul %14, %15, %cst_13 {dimension_numbers = #tpu.dot_dimension_numbers<[1], [0], [0], [1], [0, 0, 1, 1], [], []>} : vector<16x64xf32>, vector<64x128xf32>, vector<16x128xf32> -> vector<16x128xf32>
      %c0_14 = arith.constant 0 : index
      %c0_15 = arith.constant 0 : index
      %17 = vector.load %arg5[%c0_14, %c0_15] : memref<16x1xf32, #tpu.memory_space<vmem>>, vector<16x1xf32>
      %18 = vector.broadcast %17 : vector<16x1xf32> to vector<16x128xf32>
      %19 = arith.addf %16, %18 : vector<16x128xf32>
      %c0_16 = arith.constant 0 : index
      %c0_17 = arith.constant 0 : index
      %c0_18 = arith.constant 0 : index
      %20 = vector.load %arg6[%c0_16, %c0_17, %c0_18] : memref<1x16x128xf32, #tpu.memory_space<vmem>>, vector<1x16x128xf32>
      %21 = vector.shape_cast %20 : vector<1x16x128xf32> to vector<16x128xf32>
      %22 = vector.shape_cast %19 : vector<16x128xf32> to vector<1x16x128xf32>
      tpu.vector_store %arg6[%c0_16, %c0_17, %c0_18], %22 {strides = array<i32>} : memref<1x16x128xf32, #tpu.memory_space<vmem>>, vector<1x16x128xf32>,
    } else {
    }
    return
  }
  func.func @transform_0(%arg0: i32, %arg1: i32) -> (i32, i32) {
    %c0_i32 = arith.constant 0 : i32
    return %arg1, %arg0 : i32, i32
  }
  func.func @transform_1(%arg0: i32, %arg1: i32) -> (i32, i32, i32) {
    %c0_i32 = arith.constant 0 : i32
    %c0_i32_0 = arith.constant 0 : i32
    %c0_i32_1 = arith.constant 0 : i32
    %c0_i32_2 = arith.constant 0 : i32
    return %c0_i32, %c0_i32_0, %c0_i32_1 : i32, i32, i32
  }
  func.func @transform_2(%arg0: i32, %arg1: i32) -> (i32, i32) {
    %c0_i32 = arith.constant 0 : i32
    %c0_i32_0 = arith.constant 0 : i32
    %c0_i32_1 = arith.constant 0 : i32
    return %c0_i32, %c0_i32_0 : i32, i32
  }
  func.func @transform_3(%arg0: i32, %arg1: i32) -> (i32, i32) {
    %c0_i32 = arith.constant 0 : i32
    %c0_i32_0 = arith.constant 0 : i32
    %c0_i32_1 = arith.constant 0 : i32
    return %c0_i32, %c0_i32_0 : i32, i32
  }
  func.func @transform_4(%arg0: i32, %arg1: i32) -> (i32, i32, i32) {
    %c0_i32 = arith.constant 0 : i32
    %c0_i32_0 = arith.constant 0 : i32
    %c0_i32_1 = arith.constant 0 : i32
    return %arg0, %c0_i32, %c0_i32_0 : i32, i32, i32
  }
}

</mosaic_0001>

<llo_original>
// kernel: graphsage_forward.3
$region0: #{graphsage_forward.3}
  #allocation0 [shape = 'u32[]', space=smem, size = 0x4, offset = 0x4, fixed_abs, tag = 'smem constant byte address 0x4 - core index']
  #allocation1 [shape = 'u32[144,128]{1,0:T(1,128)}', space=vmem, size = 0x12000, scoped, tag = 'internal scratch']
  %s0 = inlined_call_operand.vmem [shape: f32[32,256], index: 0, kind: input, shape index: {}]
  %s1 = inlined_call_operand.vmem [shape: f32[64,32], index: 1, kind: input, shape index: {}]
  %s2 = inlined_call_operand.vmem [shape: bf16[2,64,128], index: 2, kind: output, shape index: {}]
  %s3 = sld [smem:[#allocation0]]
  $region79: #{graphsage_forward.3} parent=0
    _
  %s5 = ssub.s32 1, %s3
  %s6 = scalar_select 0, %s5, %s3
  $region1: #{graphsage_forward.3} parent=0
    #allocation2 [shape = 'u8[32768]{0}', space=vmem, size = 0x8000, scoped, tag = 'input window, operand 0']
    loop: start=0, step=1, limit=4
    $region2: #{graphsage_forward.3} parent=1 // loop_pre_header
      _
    $region3: #{graphsage_forward.3} parent=1 // loop_header
      %s8 = sphi 0, %s12
      %p9 = scmp.ge.s32.totalorder %s8, 4
      %s18 = sphi 0, %s20
      %s21 = sphi 0, %s18
      %s22 = sphi 0, %s21
      %s38 = sphi 0, %s22
      %s42 = sphi 0, %s42
      %s44 = sphi 0, %s42
      %s45 = sphi 0, %s44
      %s59 = sphi 0, %s45
      %s65 = sphi 0, %s67
      %s68 = sphi 0, %s65
      %s69 = sphi 0, %s68
      %s85 = sphi 0, %s69
    $region4: #{graphsage_forward.3} parent=1 // loop_header_branch
      %11 = sbr.rel (%p9) target = $region8
    $region5: #{graphsage_forward.3} parent=1 // loop_body
      %s13 = ssub.s32 %s8, 1
      %s14 = ssub.s32 %s8, 2
      %s15 = sadd.s32 %s8, 1
      %s16 = ssub.s32 %s8, %s15
      %p17 = scmp.eq.s32.totalorder %s16, 0
      %s19 = sadd.s32 %s18, 1
      %s20 = scalar_select %p17, %s18, %s19
      %p23 = pneg %p17
      %p24 = scmp.eq.s32.totalorder %s8, 1
      %p25 = por %p23, %p24
      %p26 = scmp.ne.s32.totalorder %s18, %s21
      %p27 = scmp.eq.s32.totalorder %s8, 0
      %p28 = por %p26, %p27
      %p29 = scmp.ne.s32.totalorder %s18, %s21
      %p30 = scmp.eq.s32.totalorder %s13, 1
      %p31 = por %p29, %p30
      %p32 = scmp.ne.s32.totalorder %s21, %s22
      %p33 = scmp.eq.s32.totalorder %s13, 0
      %p34 = por %p32, %p33
      %p35 = scmp.ne.s32.totalorder %s21, %s22
      %p36 = scmp.eq.s32.totalorder %s14, 1
      %p37 = por %p35, %p36
      %p39 = scmp.ne.s32.totalorder %s22, %s38
      %p40 = scmp.eq.s32.totalorder %s14, 0
      %p41 = por %p39, %p40
      %s43 = sadd.s32 %s42, 1
      %p46 = scmp.eq.s32.totalorder %s8, 1
      %p47 = scmp.ne.s32.totalorder %s42, %s44
      %p48 = scmp.eq.s32.totalorder %s8, 0
      %p49 = por %p47, %p48
      %p50 = scmp.ne.s32.totalorder %s42, %s44
      %p51 = scmp.eq.s32.totalorder %s13, 1
      %p52 = por %p50, %p51
      %p53 = scmp.ne.s32.totalorder %s44, %s45
      %p54 = scmp.eq.s32.totalorder %s13, 0
      %p55 = por %p53, %p54
      %p56 = scmp.ne.s32.totalorder %s44, %s45
      %p57 = scmp.eq.s32.totalorder %s14, 1
      %p58 = por %p56, %p57
      %p60 = scmp.ne.s32.totalorder %s45, %s59
      %p61 = scmp.eq.s32.totalorder %s14, 0
      %p62 = por %p60, %p61
      %s63 = ssub.s32 %s8, %s15
      %p64 = scmp.eq.s32.totalorder %s63, 0
      %s66 = sadd.s32 %s65, 1
      %s67 = scalar_select %p64, %s65, %s66
      %p70 = pneg %p64
      %p71 = scmp.eq.s32.totalorder %s8, 1
      %p72 = por %p70, %p71
      %p73 = scmp.ne.s32.totalorder %s65, %s68
      %p74 = scmp.eq.s32.totalorder %s8, 0
      %p75 = por %p73, %p74
      %p76 = scmp.ne.s32.totalorder %s65, %s68
      %p77 = scmp.eq.s32.totalorder %s13, 1
      %p78 = por %p76, %p77
      %p79 = scmp.ne.s32.totalorder %s68, %s69
      %p80 = scmp.eq.s32.totalorder %s13, 0
      %p81 = por %p79, %p80
      %p82 = scmp.ne.s32.totalorder %s68, %s69
      %p83 = scmp.eq.s32.totalorder %s14, 1
      %p84 = por %p82, %p83
      %p86 = scmp.ne.s32.totalorder %s69, %s85
      %p87 = scmp.eq.s32.totalorder %s14, 0
      %p88 = por %p86, %p87
      %p89 = scmp.le.s32.totalorder 1, %s8
      %p90 = scmp.lt.s32.totalorder %s8, 3
      %p91 = pnand %p89, %p90
      %p92 = pneg %p91
      // Predicated region
      $region9: #{graphsage_forward.3} parent=5 // pred_check
        _
      $region10: #{graphsage_forward.3} parent=5 // pred_check_branch
        %94 = sbr.rel (%p91) target = $region12
      $region11: #{graphsage_forward.3} parent=5 // pred_region
        %s95 = ssub.s32 %s8, 1
        // Predicated region
        $region13: #{graphsage_forward.3} parent=11 // pred_check
          %p96 = pneg %p55
        $region14: #{graphsage_forward.3} parent=11 // pred_check_branch
          %98 = sbr.rel (%p96) target = $region16
        $region15: #{graphsage_forward.3} parent=11 // pred_region
          _
        $region16: #{graphsage_forward.3} parent=11 // pred_fallthru
          _
      $region12: #{graphsage_forward.3} parent=5 // pred_fallthru
        _
      %p99 = scmp.lt.s32.totalorder %s8, 2
      // Predicated region
      $region17: #{graphsage_forward.3} parent=5 // pred_check
        %p100 = pneg %p99
      $region18: #{graphsage_forward.3} parent=5 // pred_check_branch
        %102 = sbr.rel (%p100) target = $region20
      $region19: #{graphsage_forward.3} parent=5 // pred_region
        // Predicated region
        $region21: #{graphsage_forward.3} parent=19 // pred_check
          %p103 = pneg %p28
        $region22: #{graphsage_forward.3} parent=19 // pred_check_branch
          %105 = sbr.rel (%p103) target = $region24
        $region23: #{graphsage_forward.3} parent=19 // pred_region
          %s106 = sand.u32 %s18, 1
          %s107 = sand.u32 %s18, 1
          %s108 = smul.addr %s107, 32
          %s109 = scalar_lea.vmem [#allocation2], %s108
          %s110 = smul.addr %s8, 8
          %s111 = scalar_lea.vmem %s0, %s110
          // Predicated region
          $region25: #{graphsage_forward.3} parent=23 // pred_check
            _
          $region26: #{graphsage_forward.3} parent=23 // pred_check_branch
            %113 = sbr.rel (0) target = $region28
          $region27: #{graphsage_forward.3} parent=23 // pred_region
            // Predicated region
            $region29: #{graphsage_forward.3} parent=27 // pred_check
              _
            $region30: #{graphsage_forward.3} parent=27 // pred_check_branch
              %115 = sbr.rel (0) target = $region32
            $region31: #{graphsage_forward.3} parent=27 // pred_region
              // Predicated region
              $region44: #{graphsage_forward.3} parent=31 // pred_check
                _
              $region45: #{graphsage_forward.3} parent=31 // pred_check_branch
                %137 = sbr.rel (0) target = $region47
              $region46: #{graphsage_forward.3} parent=31 // pred_region
                loop: start=0, step=1, limit=1
                $region48: #{graphsage_forward.3} parent=46 // loop_pre_header
                  _
                $region49: #{graphsage_forward.3} parent=46 // loop_header
                  %s139 = sphi 0, %s143
                  %p140 = scmp.ge.s32.totalorder %s139, 1
                  %s144 = sphi %s111, %s111
                  %s145 = sphi %s109, %s109
                $region50: #{graphsage_forward.3} parent=46 // loop_header_branch
                  %142 = sbr.rel (%p140) target = $region54
                $region51: #{graphsage_forward.3} parent=46 // loop_body
                  %v146 = vld [vmem:[%s144] sm:$0xff]
                  %147 = vst [vmem:[%s145] sm:$0xff] %v146
                  %v148 = vld [vmem:[%s144 + $0x10] sm:$0xff]
                  %149 = vst [vmem:[%s145 + $0x8] sm:$0xff] %v148
                  %v150 = vld [vmem:[%s144 + $0x20] sm:$0xff]
                  %151 = vst [vmem:[%s145 + $0x10] sm:$0xff] %v150
                  %v152 = vld [vmem:[%s144 + $0x30] sm:$0xff]
                  %153 = vst [vmem:[%s145 + $0x18] sm:$0xff] %v152
                $region52: #{graphsage_forward.3} parent=46 // loop_footer
                  %s143 = sadd.s32 1, %s139
                $region53: #{graphsage_forward.3} parent=46 // loop_footer_branch
                  %138 = sbr.rel target = $region49
                $region54: #{graphsage_forward.3} parent=46 // loop_exit
                  _
              $region47: #{graphsage_forward.3} parent=31 // pred_fallthru
                _
              // Predicated region
              $region55: #{graphsage_forward.3} parent=31 // pred_check
                _
              $region56: #{graphsage_forward.3} parent=31 // pred_check_branch
                %155 = sbr.rel target = $region58
              $region57: #{graphsage_forward.3} parent=31 // pred_region
                _
              $region58: #{graphsage_forward.3} parent=31 // pred_fallthru
                _
            $region32: #{graphsage_forward.3} parent=27 // pred_fallthru
              _
            // Predicated region
            $region33: #{graphsage_forward.3} parent=27 // pred_check
              _
            $region34: #{graphsage_forward.3} parent=27 // pred_check_branch
              %117 = sbr.rel target = $region36
            $region35: #{graphsage_forward.3} parent=27 // pred_region
              %s119 = ssub.s32 256, 1
              loop: start=0, step=1, limit=1
              $region37: #{graphsage_forward.3} parent=35 // loop_pre_header
                _
              $region38: #{graphsage_forward.3} parent=35 // loop_header
                %s121 = sphi 0, %s125
                %p122 = scmp.ge.s32.totalorder %s121, 1
                %s126 = sphi %s111, %s111
                %s127 = sphi %s109, %s109
              $region39: #{graphsage_forward.3} parent=35 // loop_header_branch
                %124 = sbr.rel (%p122) target = $region43
              $region40: #{graphsage_forward.3} parent=35 // loop_body
                %v128 = vld [vmem:[%s126] sm:%s119]
                %129 = vst [vmem:[%s127] sm:%s119] %v128
                %v130 = vld [vmem:[%s126 + $0x10] sm:%s119]
                %131 = vst [vmem:[%s127 + $0x8] sm:%s119] %v130
                %v132 = vld [vmem:[%s126 + $0x20] sm:%s119]
                %133 = vst [vmem:[%s127 + $0x10] sm:%s119] %v132
                %v134 = vld [vmem:[%s126 + $0x30] sm:%s119]
                %135 = vst [vmem:[%s127 + $0x18] sm:%s119] %v134
              $region41: #{graphsage_forward.3} parent=35 // loop_footer
                %s125 = sadd.s32 1, %s121
              $region42: #{graphsage_forward.3} parent=35 // loop_footer_branch
                %120 = sbr.rel target = $region38
              $region43: #{graphsage_forward.3} parent=35 // loop_exit
                _
            $region36: #{graphsage_forward.3} parent=27 // pred_fallthru
              _
          $region28: #{graphsage_forward.3} parent=23 // pred_fallthru
            _
          %156 = vnop
        $region24: #{graphsage_forward.3} parent=19 // pred_fallthru
          _
      $region20: #{graphsage_forward.3} parent=5 // pred_fallthru
        _
      %p157 = scmp.le.s32.totalorder 1, %s8
      %p158 = scmp.lt.s32.totalorder %s8, 3
      %p159 = pnand %p157, %p158
      %p160 = pneg %p159
      // Predicated region
      $region59: #{graphsage_forward.3} parent=5 // pred_check
        _
      $region60: #{graphsage_forward.3} parent=5 // pred_check_branch
        %162 = sbr.rel (%p159) target = $region62
      $region61: #{graphsage_forward.3} parent=5 // pred_region
        %s163 = ssub.s32 %s8, 1
        %s164 = sand.u32 %s21, 1
        %s165 = sand.u32 %s21, 1
        %s166 = smul.addr %s165, 32
        %s167 = scalar_lea.vmem [#allocation2], %s166
        // Predicated region
        $region63: #{graphsage_forward.3} parent=61 // pred_check
          %p168 = pneg %p34
        $region64: #{graphsage_forward.3} parent=61 // pred_check_branch
          %170 = sbr.rel (%p168) target = $region66
        $region65: #{graphsage_forward.3} parent=61 // pred_region
          _
        $region66: #{graphsage_forward.3} parent=61 // pred_fallthru
          _
        %s171 = sand.u32 %s21, 1
        %s172 = sand.u32 %s21, 1
        %s173 = smul.addr %s172, 32
        %s174 = scalar_lea.vmem [#allocation2], %s173
        %p175 = pneg %p34
        %p176 = pneg %p31
        %p177 = pneg %p55
        %p178 = pneg %p52
        %p179 = pneg %p81
        %p180 = pneg %p78
        %p181 = scmp.lt.s32.totalorder %s13, 1
        %s182 = scalar_select %p181, %s13, 1
        %s183 = smul.addr %s182, 8
        %s184 = smul.addr %s183, 4
        %s185 = scalar_lea.vmem %s2, %s184
        %p186 = scmp.lt.s32.totalorder %s13, 1
        %s187 = scalar_select %p186, %s13, 1
        %s188 = smul.addr %s187, 8
        %s189 = smul.addr %s188, 4
        %s190 = scalar_lea.vmem %s2, %s189
        %v191 = vld [vmem:[%s1] sm:$0xff]
        %v192 = vld [vmem:[%s1 + $0x8] sm:$0xff]
        %v193 = vld [vmem:[%s1 + $0x10] sm:$0xff]
        %v194 = vld [vmem:[%s1 + $0x18] sm:$0xff]
        %v195 = vld [vmem:[%s1 + $0x20] sm:$0xff]
        %v196 = vld [vmem:[%s1 + $0x28] sm:$0xff]
        %v197 = vld [vmem:[%s1 + $0x30] sm:$0xff]
        %v198 = vld [vmem:[%s1 + $0x38] sm:$0xff]
        %v199 = vld [vmem:[%s167] sm:$0xff]
        %v200 = vld [vmem:[%s167 + $0x8] sm:$0xff]
        %v201 = vld [vmem:[%s167 + $0x10] sm:$0xff]
        %v202 = vld [vmem:[%s167 + $0x18] sm:$0xff]
        %vm203 = vcmask 261120
        %v205 = vsel %vm203, %v191, 0
        %v208 = vsel %vm203, %v192, 0
        %v211 = vsel %vm203, %v193, 0
        %v214 = vsel %vm203, %v194, 0
        %v217 = vsel %vm203, %v195, 0
        %v220 = vsel %vm203, %v196, 0
        %v223 = vsel %vm203, %v197, 0
        %v226 = vsel %vm203, %v198, 0
        %228 = vmatprep.subr.mxu0 0.0
        %229 = vmatpush1.msra.mxu0 0.0
        %230 = vmatprep.subr.mxu0 0.0
        %231 = vmatpush1.msra.mxu0 0.0
        %232 = vmatprep.subr.mxu0 0.0
        %233 = vmatpush1.msra.mxu0 0.0
        %234 = vmatprep.subr.mxu0 0.0
        %235 = vmatpush1.msra.mxu0 0.0
        %236 = vmatprep.subr.mxu0 0.0
        %237 = vmatpush1.msra.mxu0 0.0
        %238 = vmatprep.subr.mxu0 0.0
        %239 = vmatpush1.msra.mxu0 0.0
        %240 = vmatprep.subr.mxu0 0.0
        %241 = vmatpush1.msra.mxu0 0.0
        %242 = vmatprep.subr.mxu0 0.0
        %243 = vmatpush1.msra.mxu0 0.0
        %244 = vmatprep.subr.mxu0 0.0
        %245 = vmatpush1.msra.mxu0 0.0
        %246 = vmatprep.subr.mxu0 0.0
        %247 = vmatpush1.msra.mxu0 0.0
        %248 = vmatprep.subr.mxu0 0.0
        %249 = vmatpush1.msra.mxu0 0.0
        %250 = vmatprep.subr.mxu0 0.0
        %251 = vmatpush1.msra.mxu0 0.0
        %252 = vmatprep.subr.mxu0 0.0
        %253 = vmatpush1.msra.mxu0 %v202
        %254 = vmatprep.subr.mxu0 0.0
        %255 = vmatpush1.msra.mxu0 %v201
        %256 = vmatprep.subr.mxu0 0.0
        %257 = vmatpush1.msra.mxu0 %v200
        %258 = vmatprep.subr.mxu0 0.0
        %259 = vmatpush1.msra.mxu0 %v199
        %260 = vmatprep.subr.mxu0 0.0
        %261 = vmatpush2.msra.mxu0 0.0
        %262 = vmatprep.subr.mxu0 0.0
        %263 = vmatpush2.msra.mxu0 0.0
        %264 = vmatprep.subr.mxu0 0.0
        %265 = vmatpush2.msra.mxu0 0.0
        %266 = vmatprep.subr.mxu0 0.0
        %267 = vmatpush2.msra.mxu0 0.0
        %268 = vmatprep.subr.mxu0 0.0
        %269 = vmatpush2.msra.mxu0 0.0
        %270 = vmatprep.subr.mxu0 0.0
        %271 = vmatpush2.msra.mxu0 0.0
        %272 = vmatprep.subr.mxu0 0.0
        %273 = vmatpush2.msra.mxu0 0.0
        %274 = vmatprep.subr.mxu0 0.0
        %275 = vmatpush2.msra.mxu0 0.0
        %276 = vmatprep.subr.mxu0 0.0
        %277 = vmatpush2.msra.mxu0 0.0
        %278 = vmatprep.subr.mxu0 0.0
        %279 = vmatpush2.msra.mxu0 0.0
        %280 = vmatprep.subr.mxu0 0.0
        %281 = vmatpush2.msra.mxu0 0.0
        %282 = vmatprep.subr.mxu0 0.0
        %283 = vmatpush2.msra.mxu0 0.0
        %284 = vmatprep.subr.mxu0 0.0
        %285 = vmatpush2.msra.mxu0 0.0
        %286 = vmatprep.subr.mxu0 0.0
        %287 = vmatpush2.msra.mxu0 0.0
        %288 = vmatprep.subr.mxu0 0.0
        %289 = vmatpush2.msra.mxu0 0.0
        %290 = vmatprep.subr.mxu0 0.0
        %291 = vmatpush2.msra.mxu0 0.0
        %292 = vmatprep.mubr.f32.mxu0 0.0
        %293 = vmatmul.mubr.f32.gmra.mxu0 %v205
        %v294 = vpop.f32.mrf.mxu0
        %v295 = vadd.f32 0.0, %v294
        %v296 = vpop.f32.mrf.mxu0
        %297 = vmatprep.mubr.f32.mxu0 0.0
        %298 = vmatmul.mubr.f32.gmra.mxu0 %v208
        %v299 = vpop.f32.mrf.mxu0
        %v300 = vadd.f32 0.0, %v299
        %v301 = vpop.f32.mrf.mxu0
        %302 = vmatprep.mubr.f32.mxu0 0.0
        %303 = vmatmul.mubr.f32.gmra.mxu0 %v211
        %v304 = vpop.f32.mrf.mxu0
        %v305 = vadd.f32 0.0, %v304
        %v306 = vpop.f32.mrf.mxu0
        %307 = vmatprep.mubr.f32.mxu0 0.0
        %308 = vmatmul.mubr.f32.gmra.mxu0 %v214
        %v309 = vpop.f32.mrf.mxu0
        %v310 = vadd.f32 0.0, %v309
        %v311 = vpop.f32.mrf.mxu0
        %312 = vmatprep.mubr.f32.mxu0 0.0
        %313 = vmatmul.mubr.f32.gmra.mxu0 %v217
        %v314 = vpop.f32.mrf.mxu0
        %v315 = vadd.f32 0.0, %v314
        %v316 = vpop.f32.mrf.mxu0
        %317 = vmatprep.mubr.f32.mxu0 0.0
        %318 = vmatmul.mubr.f32.gmra.mxu0 %v220
        %v319 = vpop.f32.mrf.mxu0
        %v320 = vadd.f32 0.0, %v319
        %v321 = vpop.f32.mrf.mxu0
        %322 = vmatprep.mubr.f32.mxu0 0.0
        %323 = vmatmul.mubr.f32.gmra.mxu0 %v223
        %v324 = vpop.f32.mrf.mxu0
        %v325 = vadd.f32 0.0, %v324
        %v326 = vpop.f32.mrf.mxu0
        %327 = vmatprep.mubr.f32.mxu0 0.0
        %328 = vmatmul.mubr.f32.gmra.mxu0 %v226
        %v329 = vpop.f32.mrf.mxu0
        %v330 = vadd.f32 0.0, %v329
        %v331 = vpop.f32.mrf.mxu0
        %332 = vdwg.mxu0
        %v333 = vpack.c.bf16 %v300, %v295
        %v334 = vpack.c.bf16 %v310, %v305
        %v335 = vpack.c.bf16 %v320, %v315
        %v336 = vpack.c.bf16 %v330, %v325
        %v341 = vunpack.c.l.b16 %v333
        %v342 = vunpack.c.h.b16 %v333
        %v343 = vunpack.c.l.b16 %v334
        %v344 = vunpack.c.h.b16 %v334
        %v345 = vunpack.c.l.b16 %v335
        %v346 = vunpack.c.h.b16 %v335
        %v347 = vunpack.c.l.b16 %v336
        %v348 = vunpack.c.h.b16 %v336
        %v349 = vpack.c.b16 %v341, %v341
        %v350 = vpack.c.b16 %v342, %v342
        %v351 = vpack.c.b16 %v343, %v343
        %v352 = vpack.c.b16 %v344, %v344
        %v353 = vpack.c.b16 %v345, %v345
        %v354 = vpack.c.b16 %v346, %v346
        %v355 = vpack.c.b16 %v347, %v347
        %v356 = vpack.c.b16 %v348, %v348
        %365 = vst [vmem:[%s190] sm:$0xf] %v349
        %366 = vst [vmem:[%s190 + $0x4] sm:$0xf] %v350
        %367 = vst [vmem:[%s190 + $0x8] sm:$0xf] %v351
        %368 = vst [vmem:[%s190 + $0xc] sm:$0xf] %v352
        %369 = vst [vmem:[%s190 + $0x10] sm:$0xf] %v353
        %370 = vst [vmem:[%s190 + $0x14] sm:$0xf] %v354
        %371 = vst [vmem:[%s190 + $0x18] sm:$0xf] %v355
        %372 = vst [vmem:[%s190 + $0x1c] sm:$0xf] %v356
        %p373 = scmp.lt.s32.totalorder %s13, 1
        %s374 = scalar_select %p373, %s13, 1
        %s375 = smul.addr %s374, 8
        %s376 = smul.addr %s375, 4
        %s377 = scalar_lea.vmem %s2, %s376
        // Predicated region
        $region67: #{graphsage_forward.3} parent=61 // pred_check
          %p378 = pneg %p78
        $region68: #{graphsage_forward.3} parent=61 // pred_check_branch
          %380 = sbr.rel (%p378) target = $region70
        $region69: #{graphsage_forward.3} parent=61 // pred_region
          _
        $region70: #{graphsage_forward.3} parent=61 // pred_fallthru
          _
      $region62: #{graphsage_forward.3} parent=5 // pred_fallthru
        _
      %p381 = scmp.le.s32.totalorder 2, %s8
      // Predicated region
      $region71: #{graphsage_forward.3} parent=5 // pred_check
        %p382 = pneg %p381
      $region72: #{graphsage_forward.3} parent=5 // pred_check_branch
        %384 = sbr.rel (%p382) target = $region74
      $region73: #{graphsage_forward.3} parent=5 // pred_region
        %s385 = ssub.s32 %s8, 2
        // Predicated region
        $region75: #{graphsage_forward.3} parent=73 // pred_check
          %p386 = pneg %p84
        $region76: #{graphsage_forward.3} parent=73 // pred_check_branch
          %388 = sbr.rel (%p386) target = $region78
        $region77: #{graphsage_forward.3} parent=73 // pred_region
          %p389 = scmp.lt.s32.totalorder %s14, 1
          %s390 = scalar_select %p389, %s14, 1
          %s391 = smul.addr %s390, 8
          %s392 = smul.addr %s391, 4
          %s393 = scalar_lea.vmem %s2, %s392
        $region78: #{graphsage_forward.3} parent=73 // pred_fallthru
          _
      $region74: #{graphsage_forward.3} parent=5 // pred_fallthru
        _
    $region6: #{graphsage_forward.3} parent=1 // loop_footer
      %s12 = sadd.s32 1, %s8
    $region7: #{graphsage_forward.3} parent=1 // loop_footer_branch
      %7 = sbr.rel target = $region3
    $region8: #{graphsage_forward.3} parent=1 // loop_exit
      _

// kernel: graphsage_forward.4
$region0: #{graphsage_forward.4}
  #allocation0 [shape = 'u32[]', space=smem, size = 0x4, offset = 0x4, fixed_abs, tag = 'smem constant byte address 0x4 - core index']
  #allocation1 [shape = 'u32[144,128]{1,0:T(1,128)}', space=vmem, size = 0x12000, scoped, tag = 'internal scratch']
  #allocation2 [shape = 'f32[64,128]{1,0:T(8,128)}', space=vmem, size = 0x8000, scoped, tag = 'scratch operand']
  %s0 = inlined_call_operand.vmem [shape: bf16[256,256], index: 0, kind: input, shape index: {}]
  %s1 = inlined_call_operand.vmem [shape: bf16[2,64,128], index: 1, kind: input, shape index: {}]
  %s2 = inlined_call_operand.vmem [shape: f32[64,1], index: 2, kind: input, shape index: {}]
  %s3 = inlined_call_operand.vmem [shape: bf16[2,64,128], index: 3, kind: output, shape index: {}]
  %s4 = sld [smem:[#allocation0]]
  $region94: #{graphsage_forward.4} parent=0
    _
  %s6 = ssub.s32 1, %s4
  %s7 = scalar_select 0, %s6, %s4
  $region1: #{graphsage_forward.4} parent=0
    #allocation3 [shape = 'u8[65536]{0}', space=vmem, size = 0x10000, scoped, tag = 'input window, operand 0']
    loop: start=0, step=1, limit=6
    $region2: #{graphsage_forward.4} parent=1 // loop_pre_header
      _
    $region3: #{graphsage_forward.4} parent=1 // loop_header
      %s9 = sphi 0, %s13
      %p10 = scmp.ge.s32.totalorder %s9, 6
      %s16 = sphi 0, %s28
      %s17 = sphi 0, %s24
      %s18 = sphi 0, %s16
      %s19 = sphi 0, %s17
      %s20 = sphi 0, %s18
      %s21 = sphi 0, %s19
      %s33 = sphi 0, %s35
      %s36 = sphi 0, %s33
      %s37 = sphi 0, %s36
      %s53 = sphi 0, %s37
      %s57 = sphi 0, %s57
      %s59 = sphi 0, %s57
      %s60 = sphi 0, %s59
      %s74 = sphi 0, %s60
      %s78 = sphi 0, %s78
      %s80 = sphi 0, %s78
      %s81 = sphi 0, %s80
      %s95 = sphi 0, %s81
      %s101 = sphi 0, %s103
      %s104 = sphi 0, %s101
      %s105 = sphi 0, %s104
      %s121 = sphi 0, %s105
    $region4: #{graphsage_forward.4} parent=1 // loop_header_branch
      %12 = sbr.rel (%p10) target = $region8
    $region5: #{graphsage_forward.4} parent=1 // loop_body
      %s14 = ssub.s32 %s9, 1
      %s15 = ssub.s32 %s9, 2
      %s22 = sadd.s32 1, %s17
      %p23 = scmp.ge.s32.totalorder %s22, 2
      %s24 = scalar_select %p23, 0, %s22
      %s25 = sadd.s32 1, %s16
      %s26 = scalar_select %p23, %s25, %s16
      %p27 = scmp.ge.s32.totalorder %s26, 2
      %s28 = scalar_select %p27, 0, %s26
      %s29 = ssub.s32 %s17, %s24
      %s30 = ssub.s32 %s16, %s28
      %s31 = sor.u32 %s29, %s30
      %p32 = scmp.eq.s32.totalorder %s31, 0
      %s34 = sadd.s32 %s33, 1
      %s35 = scalar_select %p32, %s33, %s34
      %p38 = pneg %p32
      %p39 = scmp.eq.s32.totalorder %s9, 3
      %p40 = por %p38, %p39
      %p41 = scmp.ne.s32.totalorder %s33, %s36
      %p42 = scmp.eq.s32.totalorder %s9, 0
      %p43 = por %p41, %p42
      %p44 = scmp.ne.s32.totalorder %s33, %s36
      %p45 = scmp.eq.s32.totalorder %s14, 3
      %p46 = por %p44, %p45
      %p47 = scmp.ne.s32.totalorder %s36, %s37
      %p48 = scmp.eq.s32.totalorder %s14, 0
      %p49 = por %p47, %p48
      %p50 = scmp.ne.s32.totalorder %s36, %s37
      %p51 = scmp.eq.s32.totalorder %s15, 3
      %p52 = por %p50, %p51
      %p54 = scmp.ne.s32.totalorder %s37, %s53
      %p55 = scmp.eq.s32.totalorder %s15, 0
      %p56 = por %p54, %p55
      %s58 = sadd.s32 %s57, 1
      %p61 = scmp.eq.s32.totalorder %s9, 3
      %p62 = scmp.ne.s32.totalorder %s57, %s59
      %p63 = scmp.eq.s32.totalorder %s9, 0
      %p64 = por %p62, %p63
      %p65 = scmp.ne.s32.totalorder %s57, %s59
      %p66 = scmp.eq.s32.totalorder %s14, 3
      %p67 = por %p65, %p66
      %p68 = scmp.ne.s32.totalorder %s59, %s60
      %p69 = scmp.eq.s32.totalorder %s14, 0
      %p70 = por %p68, %p69
      %p71 = scmp.ne.s32.totalorder %s59, %s60
      %p72 = scmp.eq.s32.totalorder %s15, 3
      %p73 = por %p71, %p72
      %p75 = scmp.ne.s32.totalorder %s60, %s74
      %p76 = scmp.eq.s32.totalorder %s15, 0
      %p77 = por %p75, %p76
      %s79 = sadd.s32 %s78, 1
      %p82 = scmp.eq.s32.totalorder %s9, 3
      %p83 = scmp.ne.s32.totalorder %s78, %s80
      %p84 = scmp.eq.s32.totalorder %s9, 0
      %p85 = por %p83, %p84
      %p86 = scmp.ne.s32.totalorder %s78, %s80
      %p87 = scmp.eq.s32.totalorder %s14, 3
      %p88 = por %p86, %p87
      %p89 = scmp.ne.s32.totalorder %s80, %s81
      %p90 = scmp.eq.s32.totalorder %s14, 0
      %p91 = por %p89, %p90
      %p92 = scmp.ne.s32.totalorder %s80, %s81
      %p93 = scmp.eq.s32.totalorder %s15, 3
      %p94 = por %p92, %p93
      %p96 = scmp.ne.s32.totalorder %s81, %s95
      %p97 = scmp.eq.s32.totalorder %s15, 0
      %p98 = por %p96, %p97
      %s99 = ssub.s32 %s16, %s28
      %p100 = scmp.eq.s32.totalorder %s99, 0
      %s102 = sadd.s32 %s101, 1
      %s103 = scalar_select %p100, %s101, %s102
      %p106 = pneg %p100
      %p107 = scmp.eq.s32.totalorder %s9, 3
      %p108 = por %p106, %p107
      %p109 = scmp.ne.s32.totalorder %s101, %s104
      %p110 = scmp.eq.s32.totalorder %s9, 0
      %p111 = por %p109, %p110
      %p112 = scmp.ne.s32.totalorder %s101, %s104
      %p113 = scmp.eq.s32.totalorder %s14, 3
      %p114 = por %p112, %p113
      %p115 = scmp.ne.s32.totalorder %s104, %s105
      %p116 = scmp.eq.s32.totalorder %s14, 0
      %p117 = por %p115, %p116
      %p118 = scmp.ne.s32.totalorder %s104, %s105
      %p119 = scmp.eq.s32.totalorder %s15, 3
      %p120 = por %p118, %p119
      %p122 = scmp.ne.s32.totalorder %s105, %s121
      %p123 = scmp.eq.s32.totalorder %s15, 0
      %p124 = por %p122, %p123
      %p125 = scmp.le.s32.totalorder 1, %s9
      %p126 = scmp.lt.s32.totalorder %s9, 5
      %p127 = pnand %p125, %p126
      %p128 = pneg %p127
      // Predicated region
      $region9: #{graphsage_forward.4} parent=5 // pred_check
        _
      $region10: #{graphsage_forward.4} parent=5 // pred_check_branch
        %130 = sbr.rel (%p127) target = $region12
      $region11: #{graphsage_forward.4} parent=5 // pred_region
        %s131 = ssub.s32 %s9, 1
        // Predicated region
        $region13: #{graphsage_forward.4} parent=11 // pred_check
          %p132 = pneg %p70
        $region14: #{graphsage_forward.4} parent=11 // pred_check_branch
          %134 = sbr.rel (%p132) target = $region16
        $region15: #{graphsage_forward.4} parent=11 // pred_region
          _
        $region16: #{graphsage_forward.4} parent=11 // pred_fallthru
          _
        // Predicated region
        $region17: #{graphsage_forward.4} parent=11 // pred_check
          %p135 = pneg %p91
        $region18: #{graphsage_forward.4} parent=11 // pred_check_branch
          %137 = sbr.rel (%p135) target = $region20
        $region19: #{graphsage_forward.4} parent=11 // pred_region
          _
        $region20: #{graphsage_forward.4} parent=11 // pred_fallthru
          _
      $region12: #{graphsage_forward.4} parent=5 // pred_fallthru
        _
      %p138 = scmp.lt.s32.totalorder %s9, 4
      // Predicated region
      $region21: #{graphsage_forward.4} parent=5 // pred_check
        %p139 = pneg %p138
      $region22: #{graphsage_forward.4} parent=5 // pred_check_branch
        %141 = sbr.rel (%p139) target = $region24
      $region23: #{graphsage_forward.4} parent=5 // pred_region
        // Predicated region
        $region25: #{graphsage_forward.4} parent=23 // pred_check
          %p142 = pneg %p43
        $region26: #{graphsage_forward.4} parent=23 // pred_check_branch
          %144 = sbr.rel (%p142) target = $region28
        $region27: #{graphsage_forward.4} parent=23 // pred_region
          %s145 = sand.u32 %s33, 1
          %s146 = sand.u32 %s33, 1
          %s147 = smul.addr %s146, 64
          %s148 = scalar_lea.vmem [#allocation3], %s147
          %s149 = smul.u32 16, %s17
          %s150 = smul.addr %s149, 2
          %s151 = sadd.s32 %s16, %s150
          %s152 = smul.addr %s151, 4
          %s153 = scalar_lea.vmem %s0, %s152
          // Predicated region
          $region29: #{graphsage_forward.4} parent=27 // pred_check
            _
          $region30: #{graphsage_forward.4} parent=27 // pred_check_branch
            %155 = sbr.rel (0) target = $region32
          $region31: #{graphsage_forward.4} parent=27 // pred_region
            // Predicated region
            $region33: #{graphsage_forward.4} parent=31 // pred_check
              _
            $region34: #{graphsage_forward.4} parent=31 // pred_check_branch
              %157 = sbr.rel target = $region36
            $region35: #{graphsage_forward.4} parent=31 // pred_region
              // Predicated region
              $region48: #{graphsage_forward.4} parent=35 // pred_check
                _
              $region49: #{graphsage_forward.4} parent=35 // pred_check_branch
                %203 = sbr.rel (0) target = $region51
              $region50: #{graphsage_forward.4} parent=35 // pred_region
                loop: start=0, step=1, limit=1
                $region52: #{graphsage_forward.4} parent=50 // loop_pre_header
                  _
                $region53: #{graphsage_forward.4} parent=50 // loop_header
                  %s205 = sphi 0, %s209
                  %p206 = scmp.ge.s32.totalorder %s205, 1
                  %s210 = sphi %s153, %s153
                  %s211 = sphi %s148, %s148
                $region54: #{graphsage_forward.4} parent=50 // loop_header_branch
                  %208 = sbr.rel (%p206) target = $region58
                $region55: #{graphsage_forward.4} parent=50 // loop_body
                  _
                $region56: #{graphsage_forward.4} parent=50 // loop_footer
                  %s209 = sadd.s32 1, %s205
                $region57: #{graphsage_forward.4} parent=50 // loop_footer_branch
                  %204 = sbr.rel target = $region53
                $region58: #{graphsage_forward.4} parent=50 // loop_exit
                  _
                %s213 = ssub.s32 16, 1
                loop: start=0, step=1, limit=1
                $region59: #{graphsage_forward.4} parent=50 // loop_pre_header
                  _
                $region60: #{graphsage_forward.4} parent=50 // loop_header
                  %s215 = sphi 0, %s219
                  %p216 = scmp.ge.s32.totalorder %s215, 1
                  %s220 = sphi %s153, %s153
                  %s221 = sphi %s148, %s148
                $region61: #{graphsage_forward.4} parent=50 // loop_header_branch
                  %218 = sbr.rel (%p216) target = $region65
                $region62: #{graphsage_forward.4} parent=50 // loop_body
                  %v222 = vld [vmem:[%s220] sm:%s213]
                  %223 = vst [vmem:[%s221] sm:%s213] %v222
                  %v224 = vld [vmem:[%s220 + $0x8] sm:%s213]
                  %225 = vst [vmem:[%s221 + $0x4] sm:%s213] %v224
                  %v226 = vld [vmem:[%s220 + $0x10] sm:%s213]
                  %227 = vst [vmem:[%s221 + $0x8] sm:%s213] %v226
                  %v228 = vld [vmem:[%s220 + $0x18] sm:%s213]
                  %229 = vst [vmem:[%s221 + $0xc] sm:%s213] %v228
                  %v230 = vld [vmem:[%s220 + $0x20] sm:%s213]
                  %231 = vst [vmem:[%s221 + $0x10] sm:%s213] %v230
                  %v232 = vld [vmem:[%s220 + $0x28] sm:%s213]
                  %233 = vst [vmem:[%s221 + $0x14] sm:%s213] %v232
                  %v234 = vld [vmem:[%s220 + $0x30] sm:%s213]
                  %235 = vst [vmem:[%s221 + $0x18] sm:%s213] %v234
                  %v236 = vld [vmem:[%s220 + $0x38] sm:%s213]
                  %237 = vst [vmem:[%s221 + $0x1c] sm:%s213] %v236
                  %v238 = vld [vmem:[%s220 + $0x40] sm:%s213]
                  %239 = vst [vmem:[%s221 + $0x20] sm:%s213] %v238
                  %v240 = vld [vmem:[%s220 + $0x48] sm:%s213]
                  %241 = vst [vmem:[%s221 + $0x24] sm:%s213] %v240
                  %v242 = vld [vmem:[%s220 + $0x50] sm:%s213]
                  %243 = vst [vmem:[%s221 + $0x28] sm:%s213] %v242
                  %v244 = vld [vmem:[%s220 + $0x58] sm:%s213]
                  %245 = vst [vmem:[%s221 + $0x2c] sm:%s213] %v244
                  %v246 = vld [vmem:[%s220 + $0x60] sm:%s213]
                  %247 = vst [vmem:[%s221 + $0x30] sm:%s213] %v246
                  %v248 = vld [vmem:[%s220 + $0x68] sm:%s213]
                  %249 = vst [vmem:[%s221 + $0x34] sm:%s213] %v248
                  %v250 = vld [vmem:[%s220 + $0x70] sm:%s213]
                  %251 = vst [vmem:[%s221 + $0x38] sm:%s213] %v250
                  %v252 = vld [vmem:[%s220 + $0x78] sm:%s213]
                  %253 = vst [vmem:[%s221 + $0x3c] sm:%s213] %v252
                $region63: #{graphsage_forward.4} parent=50 // loop_footer
                  %s219 = sadd.s32 1, %s215
                $region64: #{graphsage_forward.4} parent=50 // loop_footer_branch
                  %214 = sbr.rel target = $region60
                $region65: #{graphsage_forward.4} parent=50 // loop_exit
                  _
              $region51: #{graphsage_forward.4} parent=35 // pred_fallthru
                _
            $region36: #{graphsage_forward.4} parent=31 // pred_fallthru
              _
            // Predicated region
            $region37: #{graphsage_forward.4} parent=31 // pred_check
              _
            $region38: #{graphsage_forward.4} parent=31 // pred_check_branch
              %159 = sbr.rel (0) target = $region40
            $region39: #{graphsage_forward.4} parent=31 // pred_region
              %s161 = ssub.s32 16, 1
              loop: start=0, step=1, limit=1
              $region41: #{graphsage_forward.4} parent=39 // loop_pre_header
                _
              $region42: #{graphsage_forward.4} parent=39 // loop_header
                %s163 = sphi 0, %s167
                %p164 = scmp.ge.s32.totalorder %s163, 1
                %s168 = sphi %s153, %s153
                %s169 = sphi %s148, %s148
              $region43: #{graphsage_forward.4} parent=39 // loop_header_branch
                %166 = sbr.rel (%p164) target = $region47
              $region44: #{graphsage_forward.4} parent=39 // loop_body
                %v170 = vld [vmem:[%s168] sm:%s161]
                %171 = vst [vmem:[%s169] sm:%s161] %v170
                %v172 = vld [vmem:[%s168 + $0x8] sm:%s161]
                %173 = vst [vmem:[%s169 + $0x4] sm:%s161] %v172
                %v174 = vld [vmem:[%s168 + $0x10] sm:%s161]
                %175 = vst [vmem:[%s169 + $0x8] sm:%s161] %v174
                %v176 = vld [vmem:[%s168 + $0x18] sm:%s161]
                %177 = vst [vmem:[%s169 + $0xc] sm:%s161] %v176
                %v178 = vld [vmem:[%s168 + $0x20] sm:%s161]
                %179 = vst [vmem:[%s169 + $0x10] sm:%s161] %v178
                %v180 = vld [vmem:[%s168 + $0x28] sm:%s161]
                %181 = vst [vmem:[%s169 + $0x14] sm:%s161] %v180
                %v182 = vld [vmem:[%s168 + $0x30] sm:%s161]
                %183 = vst [vmem:[%s169 + $0x18] sm:%s161] %v182
                %v184 = vld [vmem:[%s168 + $0x38] sm:%s161]
                %185 = vst [vmem:[%s169 + $0x1c] sm:%s161] %v184
                %v186 = vld [vmem:[%s168 + $0x40] sm:%s161]
                %187 = vst [vmem:[%s169 + $0x20] sm:%s161] %v186
                %v188 = vld [vmem:[%s168 + $0x48] sm:%s161]
                %189 = vst [vmem:[%s169 + $0x24] sm:%s161] %v188
                %v190 = vld [vmem:[%s168 + $0x50] sm:%s161]
                %191 = vst [vmem:[%s169 + $0x28] sm:%s161] %v190
                %v192 = vld [vmem:[%s168 + $0x58] sm:%s161]
                %193 = vst [vmem:[%s169 + $0x2c] sm:%s161] %v192
                %v194 = vld [vmem:[%s168 + $0x60] sm:%s161]
                %195 = vst [vmem:[%s169 + $0x30] sm:%s161] %v194
                %v196 = vld [vmem:[%s168 + $0x68] sm:%s161]
                %197 = vst [vmem:[%s169 + $0x34] sm:%s161] %v196
                %v198 = vld [vmem:[%s168 + $0x70] sm:%s161]
                %199 = vst [vmem:[%s169 + $0x38] sm:%s161] %v198
                %v200 = vld [vmem:[%s168 + $0x78] sm:%s161]
                %201 = vst [vmem:[%s169 + $0x3c] sm:%s161] %v200
              $region45: #{graphsage_forward.4} parent=39 // loop_footer
                %s167 = sadd.s32 1, %s163
              $region46: #{graphsage_forward.4} parent=39 // loop_footer_branch
                %162 = sbr.rel target = $region42
              $region47: #{graphsage_forward.4} parent=39 // loop_exit
                _
            $region40: #{graphsage_forward.4} parent=31 // pred_fallthru
              _
          $region32: #{graphsage_forward.4} parent=27 // pred_fallthru
            _
          %254 = vnop
        $region28: #{graphsage_forward.4} parent=23 // pred_fallthru
          _
      $region24: #{graphsage_forward.4} parent=5 // pred_fallthru
        _
      %p255 = scmp.le.s32.totalorder 1, %s9
      %p256 = scmp.lt.s32.totalorder %s9, 5
      %p257 = pnand %p255, %p256
      %p258 = pneg %p257
      // Predicated region
      $region66: #{graphsage_forward.4} parent=5 // pred_check
        _
      $region67: #{graphsage_forward.4} parent=5 // pred_check_branch
        %260 = sbr.rel (%p257) target = $region69
      $region68: #{graphsage_forward.4} parent=5 // pred_region
        %s261 = ssub.s32 %s9, 1
        %s262 = sand.u32 %s36, 1
        %s263 = sand.u32 %s36, 1
        %s264 = smul.addr %s263, 64
        %s265 = scalar_lea.vmem [#allocation3], %s264
        // Predicated region
        $region70: #{graphsage_forward.4} parent=68 // pred_check
          %p266 = pneg %p49
        $region71: #{graphsage_forward.4} parent=68 // pred_check_branch
          %268 = sbr.rel (%p266) target = $region73
        $region72: #{graphsage_forward.4} parent=68 // pred_region
          _
        $region73: #{graphsage_forward.4} parent=68 // pred_fallthru
          _
        %s269 = sand.u32 %s36, 1
        %s270 = sand.u32 %s36, 1
        %s271 = smul.addr %s270, 64
        %s272 = scalar_lea.vmem [#allocation3], %s271
        %p273 = pneg %p49
        %p274 = pneg %p46
        %p275 = pneg %p70
        %p276 = pneg %p67
        %p277 = pneg %p91
        %p278 = pneg %p88
        %p279 = pneg %p117
        %p280 = pneg %p114
        %p281 = scmp.lt.s32.totalorder %s18, 1
        %s282 = scalar_select %p281, %s18, 1
        %s283 = smul.addr %s282, 8
        %s284 = smul.addr %s283, 4
        %s285 = scalar_lea.vmem %s3, %s284
        %s286 = smul.u32 16, %s19
        %p287 = scmp.lt.s32.totalorder %s18, 1
        %s288 = scalar_select %p287, %s18, 1
        %s289 = smul.addr %s288, 8
        %s290 = smul.addr %s289, 4
        %s291 = scalar_lea.vmem %s3, %s290
        %p293 = scmp.eq.s32.totalorder %s19, 0
        // Predicated region
        $region74: #{graphsage_forward.4} parent=68 // pred_check
          %p294 = pneg %p293
        $region75: #{graphsage_forward.4} parent=68 // pred_check_branch
          %296 = sbr.rel (%p294) target = $region77
        $region76: #{graphsage_forward.4} parent=68 // pred_region
          %s297 = smul.u32 %s18, 8
          %s298 = smul.addr %s297, 4
          %s299 = scalar_lea.vmem %s1, %s298
          %v300 = vld [vmem:[%s299] sm:$0xf]
          %v301 = vld [vmem:[%s299 + $0x4] sm:$0xf]
          %v302 = vld [vmem:[%s299 + $0x8] sm:$0xf]
          %v303 = vld [vmem:[%s299 + $0xc] sm:$0xf]
          %v304 = vld [vmem:[%s299 + $0x10] sm:$0xf]
          %v305 = vld [vmem:[%s299 + $0x14] sm:$0xf]
          %v306 = vld [vmem:[%s299 + $0x18] sm:$0xf]
          %v307 = vld [vmem:[%s299 + $0x1c] sm:$0xf]
          %v308 = vunpack.c.l.bf16 %v300
          %v309 = vunpack.c.l.bf16 %v301
          %v310 = vunpack.c.l.bf16 %v302
          %v311 = vunpack.c.l.bf16 %v303
          %v312 = vunpack.c.l.bf16 %v304
          %v313 = vunpack.c.l.bf16 %v305
          %v314 = vunpack.c.l.bf16 %v306
          %v315 = vunpack.c.l.bf16 %v307
          %316 = vst [vmem:[#allocation2] sm:$0xff] %v308
          %317 = vst [vmem:[#allocation2 + $0x8] sm:$0xff] %v309
          %318 = vst [vmem:[#allocation2 + $0x10] sm:$0xff] %v310
          %319 = vst [vmem:[#allocation2 + $0x18] sm:$0xff] %v311
          %320 = vst [vmem:[#allocation2 + $0x20] sm:$0xff] %v312
          %321 = vst [vmem:[#allocation2 + $0x28] sm:$0xff] %v313
          %322 = vst [vmem:[#allocation2 + $0x30] sm:$0xff] %v314
          %323 = vst [vmem:[#allocation2 + $0x38] sm:$0xff] %v315
        $region77: #{graphsage_forward.4} parent=68 // pred_fallthru
          _
        %v324 = vld [vmem:[#allocation2] sm:$0xff]
        %v325 = vld [vmem:[#allocation2 + $0x8] sm:$0xff]
        %v326 = vld [vmem:[#allocation2 + $0x10] sm:$0xff]
        %v327 = vld [vmem:[#allocation2 + $0x18] sm:$0xff]
        %v328 = vld [vmem:[#allocation2 + $0x20] sm:$0xff]
        %v329 = vld [vmem:[#allocation2 + $0x28] sm:$0xff]
        %v330 = vld [vmem:[#allocation2 + $0x30] sm:$0xff]
        %v331 = vld [vmem:[#allocation2 + $0x38] sm:$0xff]
        %s332 = smul.u32 %s19, 8
        %s333 = smul.addr %s332, 4
        %s334 = scalar_lea.vmem %s1, %s333
        %v335 = vld [vmem:[%s334] sm:$0xf]
        %v336 = vld [vmem:[%s334 + $0x4] sm:$0xf]
        %v337 = vld [vmem:[%s334 + $0x8] sm:$0xf]
        %v338 = vld [vmem:[%s334 + $0xc] sm:$0xf]
        %v339 = vld [vmem:[%s334 + $0x10] sm:$0xf]
        %v340 = vld [vmem:[%s334 + $0x14] sm:$0xf]
        %v341 = vld [vmem:[%s334 + $0x18] sm:$0xf]
        %v342 = vld [vmem:[%s334 + $0x1c] sm:$0xf]
        %v343 = vld [vmem:[%s265] sm:$0xf]
        %v344 = vld [vmem:[%s265 + $0x4] sm:$0xf]
        %v345 = vld [vmem:[%s265 + $0x8] sm:$0xf]
        %v346 = vld [vmem:[%s265 + $0xc] sm:$0xf]
        %v347 = vld [vmem:[%s265 + $0x10] sm:$0xf]
        %v348 = vld [vmem:[%s265 + $0x14] sm:$0xf]
        %v349 = vld [vmem:[%s265 + $0x18] sm:$0xf]
        %v350 = vld [vmem:[%s265 + $0x1c] sm:$0xf]
        %v351 = vld [vmem:[%s265 + $0x20] sm:$0xf]
        %v352 = vld [vmem:[%s265 + $0x24] sm:$0xf]
        %v353 = vld [vmem:[%s265 + $0x28] sm:$0xf]
        %v354 = vld [vmem:[%s265 + $0x2c] sm:$0xf]
        %v355 = vld [vmem:[%s265 + $0x30] sm:$0xf]
        %v356 = vld [vmem:[%s265 + $0x34] sm:$0xf]
        %v357 = vld [vmem:[%s265 + $0x38] sm:$0xf]
        %v358 = vld [vmem:[%s265 + $0x3c] sm:$0xf]
        %v367 = vunpack.c.l.b16 %v335
        %v368 = vunpack.c.l.b16 %v336
        %v369 = vunpack.c.l.b16 %v337
        %v370 = vunpack.c.l.b16 %v338
        %v371 = vunpack.c.l.b16 %v339
        %v372 = vunpack.c.l.b16 %v340
        %v373 = vunpack.c.l.b16 %v341
        %v374 = vunpack.c.l.b16 %v342
        %v375 = vpack.c.b16 %v368, %v367
        %v376 = vpack.c.b16 %v370, %v369
        %v377 = vpack.c.b16 %v372, %v371
        %v378 = vpack.c.b16 %v374, %v373
        %v399 = vunpack.c.l.b16 %v343
        %v400 = vunpack.c.l.b16 %v344
        %v401 = vunpack.c.l.b16 %v345
        %v402 = vunpack.c.l.b16 %v346
        %v403 = vunpack.c.l.b16 %v347
        %v404 = vunpack.c.l.b16 %v348
        %v405 = vunpack.c.l.b16 %v349
        %v406 = vunpack.c.l.b16 %v350
        %v407 = vunpack.c.l.b16 %v351
        %v408 = vunpack.c.l.b16 %v352
        %v409 = vunpack.c.l.b16 %v353
        %v410 = vunpack.c.l.b16 %v354
        %v411 = vunpack.c.l.b16 %v355
        %v412 = vunpack.c.l.b16 %v356
        %v413 = vunpack.c.l.b16 %v357
        %v414 = vunpack.c.l.b16 %v358
        %v415 = vpack.c.b16 %v400, %v399
        %v416 = vpack.c.b16 %v402, %v401
        %v417 = vpack.c.b16 %v404, %v403
        %v418 = vpack.c.b16 %v406, %v405
        %v419 = vpack.c.b16 %v408, %v407
        %v420 = vpack.c.b16 %v410, %v409
        %v421 = vpack.c.b16 %v412, %v411
        %v422 = vpack.c.b16 %v414, %v413
        %431 = vmatprep.subr.bf16.mxu0 0
        %432 = vmatpush1.bf16.msra.mxu0 %v422
        %433 = vmatprep.subr.bf16.mxu0 0
        %434 = vmatpush1.bf16.msra.mxu0 %v421
        %435 = vmatprep.subr.bf16.mxu0 0
        %436 = vmatpush1.bf16.msra.mxu0 %v420
        %437 = vmatprep.subr.bf16.mxu0 0
        %438 = vmatpush1.bf16.msra.mxu0 %v419
        %439 = vmatprep.subr.bf16.mxu0 0
        %440 = vmatpush1.bf16.msra.mxu0 %v418
        %441 = vmatprep.subr.bf16.mxu0 0
        %442 = vmatpush1.bf16.msra.mxu0 %v417
        %443 = vmatprep.subr.bf16.mxu0 0
        %444 = vmatpush1.bf16.msra.mxu0 %v416
        %445 = vmatprep.subr.bf16.mxu0 0
        %446 = vmatpush1.bf16.msra.mxu0 %v415
        %447 = vmatprep.subr.bf16.mxu0 0
        %448 = vmatpush2.bf16.msra.mxu0 0
        %449 = vmatprep.subr.bf16.mxu0 0
        %450 = vmatpush2.bf16.msra.mxu0 0
        %451 = vmatprep.subr.bf16.mxu0 0
        %452 = vmatpush2.bf16.msra.mxu0 0
        %453 = vmatprep.subr.bf16.mxu0 0
        %454 = vmatpush2.bf16.msra.mxu0 0
        %455 = vmatprep.subr.bf16.mxu0 0
        %456 = vmatpush2.bf16.msra.mxu0 0
        %457 = vmatprep.subr.bf16.mxu0 0
        %458 = vmatpush2.bf16.msra.mxu0 0
        %459 = vmatprep.subr.bf16.mxu0 0
        %460 = vmatpush2.bf16.msra.mxu0 0
        %461 = vmatprep.subr.bf16.mxu0 0
        %462 = vmatpush2.bf16.msra.mxu0 0
        %463 = vmatprep.mubr.bf16.mxu0 0
        %464 = vmatmul.mubr.bf16.gmra.mxu0 %v375
        %v465 = vpop.f32.mrf.mxu0
        %v466 = vadd.f32 0.0, %v465
        %v467 = vpop.f32.mrf.mxu0
        %v468 = vpop.f32.mrf.mxu0
        %v469 = vadd.f32 0.0, %v468
        %v470 = vpop.f32.mrf.mxu0
        %471 = vmatprep.mubr.bf16.mxu0 0
        %472 = vmatmul.mubr.bf16.gmra.mxu0 %v376
        %v473 = vpop.f32.mrf.mxu0
        %v474 = vadd.f32 0.0, %v473
        %v475 = vpop.f32.mrf.mxu0
        %v476 = vpop.f32.mrf.mxu0
        %v477 = vadd.f32 0.0, %v476
        %v478 = vpop.f32.mrf.mxu0
        %479 = vmatprep.mubr.bf16.mxu0 0
        %480 = vmatmul.mubr.bf16.gmra.mxu0 %v377
        %v481 = vpop.f32.mrf.mxu0
        %v482 = vadd.f32 0.0, %v481
        %v483 = vpop.f32.mrf.mxu0
        %v484 = vpop.f32.mrf.mxu0
        %v485 = vadd.f32 0.0, %v484
        %v486 = vpop.f32.mrf.mxu0
        %487 = vmatprep.mubr.bf16.mxu0 0
        %488 = vmatmul.mubr.bf16.gmra.mxu0 %v378
        %v489 = vpop.f32.mrf.mxu0
        %v490 = vadd.f32 0.0, %v489
        %v491 = vpop.f32.mrf.mxu0
        %v492 = vpop.f32.mrf.mxu0
        %v493 = vadd.f32 0.0, %v492
        %v494 = vpop.f32.mrf.mxu0
        %495 = vdwg.mxu0
        %v496 = vadd.f32 %v324, %v466
        %v497 = vadd.f32 %v325, %v469
        %v498 = vadd.f32 %v326, %v474
        %v499 = vadd.f32 %v327, %v477
        %v500 = vadd.f32 %v328, %v482
        %v501 = vadd.f32 %v329, %v485
        %v502 = vadd.f32 %v330, %v490
        %v503 = vadd.f32 %v331, %v493
        %504 = vst [vmem:[#allocation2] sm:$0xff] %v496
        %505 = vst [vmem:[#allocation2 + $0x8] sm:$0xff] %v497
        %506 = vst [vmem:[#allocation2 + $0x10] sm:$0xff] %v498
        %507 = vst [vmem:[#allocation2 + $0x18] sm:$0xff] %v499
        %508 = vst [vmem:[#allocation2 + $0x20] sm:$0xff] %v500
        %509 = vst [vmem:[#allocation2 + $0x28] sm:$0xff] %v501
        %510 = vst [vmem:[#allocation2 + $0x30] sm:$0xff] %v502
        %511 = vst [vmem:[#allocation2 + $0x38] sm:$0xff] %v503
        %p512 = scmp.eq.s32.totalorder %s19, 1
        // Predicated region
        $region78: #{graphsage_forward.4} parent=68 // pred_check
          %p513 = pneg %p512
        $region79: #{graphsage_forward.4} parent=68 // pred_check_branch
          %515 = sbr.rel (%p513) target = $region81
        $region80: #{graphsage_forward.4} parent=68 // pred_region
          %v516 = vld [vmem:[#allocation2] sm:$0xff]
          %v517 = vld [vmem:[#allocation2 + $0x8] sm:$0xff]
          %v518 = vld [vmem:[#allocation2 + $0x10] sm:$0xff]
          %v519 = vld [vmem:[#allocation2 + $0x18] sm:$0xff]
          %v520 = vld [vmem:[#allocation2 + $0x20] sm:$0xff]
          %v521 = vld [vmem:[#allocation2 + $0x28] sm:$0xff]
          %v522 = vld [vmem:[#allocation2 + $0x30] sm:$0xff]
          %v523 = vld [vmem:[#allocation2 + $0x38] sm:$0xff]
          %v524 = vld [vmem:[%s2] sm:$0xff]
          %v525 = vld [vmem:[%s2 + $0x8] sm:$0xff]
          %v526 = vld [vmem:[%s2 + $0x10] sm:$0xff]
          %v527 = vld [vmem:[%s2 + $0x18] sm:$0xff]
          %v528 = vld [vmem:[%s2 + $0x20] sm:$0xff]
          %v529 = vld [vmem:[%s2 + $0x28] sm:$0xff]
          %v530 = vld [vmem:[%s2 + $0x30] sm:$0xff]
          %v531 = vld [vmem:[%s2 + $0x38] sm:$0xff]
          %533 = vset.pattern.permute.xlu0 0
          %534 = vperm.xlu0 %533, %v524
          %v535 = vpop.permute.xlu0 %534
          %538 = vset.pattern.permute.xlu0 0
          %539 = vperm.xlu0 %538, %v525
          %v540 = vpop.permute.xlu0 %539
          %543 = vset.pattern.permute.xlu0 0
          %544 = vperm.xlu0 %543, %v526
          %v545 = vpop.permute.xlu0 %544
          %548 = vset.pattern.permute.xlu0 0
          %549 = vperm.xlu0 %548, %v527
          %v550 = vpop.permute.xlu0 %549
          %553 = vset.pattern.permute.xlu0 0
          %554 = vperm.xlu0 %553, %v528
          %v555 = vpop.permute.xlu0 %554
          %558 = vset.pattern.permute.xlu0 0
          %559 = vperm.xlu0 %558, %v529
          %v560 = vpop.permute.xlu0 %559
          %563 = vset.pattern.permute.xlu0 0
          %564 = vperm.xlu0 %563, %v530
          %v565 = vpop.permute.xlu0 %564
          %568 = vset.pattern.permute.xlu0 0
          %569 = vperm.xlu0 %568, %v531
          %v570 = vpop.permute.xlu0 %569
          %v572 = vadd.f32 %v516, %v535
          %v573 = vadd.f32 %v517, %v540
          %v574 = vadd.f32 %v518, %v545
          %v575 = vadd.f32 %v519, %v550
          %v576 = vadd.f32 %v520, %v555
          %v577 = vadd.f32 %v521, %v560
          %v578 = vadd.f32 %v522, %v565
          %v579 = vadd.f32 %v523, %v570
          %v580 = vmax.f32 %v572, 0.0
          %v581 = vmax.f32 %v573, 0.0
          %v582 = vmax.f32 %v574, 0.0
          %v583 = vmax.f32 %v575, 0.0
          %v584 = vmax.f32 %v576, 0.0
          %v585 = vmax.f32 %v577, 0.0
          %v586 = vmax.f32 %v578, 0.0
          %v587 = vmax.f32 %v579, 0.0
          %v588 = vpack.c.bf16 %v581, %v580
          %v589 = vpack.c.bf16 %v583, %v582
          %v590 = vpack.c.bf16 %v585, %v584
          %v591 = vpack.c.bf16 %v587, %v586
          %v596 = vunpack.c.l.b16 %v588
          %v597 = vunpack.c.h.b16 %v588
          %v598 = vunpack.c.l.b16 %v589
          %v599 = vunpack.c.h.b16 %v589
          %v600 = vunpack.c.l.b16 %v590
          %v601 = vunpack.c.h.b16 %v590
          %v602 = vunpack.c.l.b16 %v591
          %v603 = vunpack.c.h.b16 %v591
          %v604 = vpack.c.b16 %v596, %v596
          %v605 = vpack.c.b16 %v597, %v597
          %v606 = vpack.c.b16 %v598, %v598
          %v607 = vpack.c.b16 %v599, %v599
          %v608 = vpack.c.b16 %v600, %v600
          %v609 = vpack.c.b16 %v601, %v601
          %v610 = vpack.c.b16 %v602, %v602
          %v611 = vpack.c.b16 %v603, %v603
          %620 = vst [vmem:[%s291] sm:$0xf] %v604
          %621 = vst [vmem:[%s291 + $0x4] sm:$0xf] %v605
          %622 = vst [vmem:[%s291 + $0x8] sm:$0xf] %v606
          %623 = vst [vmem:[%s291 + $0xc] sm:$0xf] %v607
          %624 = vst [vmem:[%s291 + $0x10] sm:$0xf] %v608
          %625 = vst [vmem:[%s291 + $0x14] sm:$0xf] %v609
          %626 = vst [vmem:[%s291 + $0x18] sm:$0xf] %v610
          %627 = vst [vmem:[%s291 + $0x1c] sm:$0xf] %v611
        $region81: #{graphsage_forward.4} parent=68 // pred_fallthru
          _
        %p628 = scmp.lt.s32.totalorder %s18, 1
        %s629 = scalar_select %p628, %s18, 1
        %s630 = smul.addr %s629, 8
        %s631 = smul.addr %s630, 4
        %s632 = scalar_lea.vmem %s3, %s631
        // Predicated region
        $region82: #{graphsage_forward.4} parent=68 // pred_check
          %p633 = pneg %p114
        $region83: #{graphsage_forward.4} parent=68 // pred_check_branch
          %635 = sbr.rel (%p633) target = $region85
        $region84: #{graphsage_forward.4} parent=68 // pred_region
          _
        $region85: #{graphsage_forward.4} parent=68 // pred_fallthru
          _
      $region69: #{graphsage_forward.4} parent=5 // pred_fallthru
        _
      %p636 = scmp.le.s32.totalorder 2, %s9
      // Predicated region
      $region86: #{graphsage_forward.4} parent=5 // pred_check
        %p637 = pneg %p636
      $region87: #{graphsage_forward.4} parent=5 // pred_check_branch
        %639 = sbr.rel (%p637) target = $region89
      $region88: #{graphsage_forward.4} parent=5 // pred_region
        %s640 = ssub.s32 %s9, 2
        // Predicated region
        $region90: #{graphsage_forward.4} parent=88 // pred_check
          %p641 = pneg %p120
        $region91: #{graphsage_forward.4} parent=88 // pred_check_branch
          %643 = sbr.rel (%p641) target = $region93
        $region92: #{graphsage_forward.4} parent=88 // pred_region
          %p644 = scmp.lt.s32.totalorder %s20, 1
          %s645 = scalar_select %p644, %s20, 1
          %s646 = smul.addr %s645, 8
          %s647 = smul.addr %s646, 4
          %s648 = scalar_lea.vmem %s3, %s647
        $region93: #{graphsage_forward.4} parent=88 // pred_fallthru
          _
      $region89: #{graphsage_forward.4} parent=5 // pred_fallthru
        _
    $region6: #{graphsage_forward.4} parent=1 // loop_footer
      %s13 = sadd.s32 1, %s9
    $region7: #{graphsage_forward.4} parent=1 // loop_footer_branch
      %8 = sbr.rel target = $region3
    $region8: #{graphsage_forward.4} parent=1 // loop_exit
      _

// kernel: graphsage_forward.5
$region0: #{graphsage_forward.5}
  #allocation0 [shape = 'u32[]', space=smem, size = 0x4, offset = 0x4, fixed_abs, tag = 'smem constant byte address 0x4 - core index']
  #allocation1 [shape = 'u32[144,128]{1,0:T(1,128)}', space=vmem, size = 0x12000, scoped, tag = 'internal scratch']
  #allocation2 [shape = 'f32[64,128]{1,0:T(8,128)}', space=vmem, size = 0x8000, scoped, tag = 'scratch operand']
  %s0 = inlined_call_operand.vmem [shape: bf16[256,256], index: 0, kind: input, shape index: {}]
  %s1 = inlined_call_operand.vmem [shape: bf16[2,64,128], index: 1, kind: input, shape index: {}]
  %s2 = inlined_call_operand.vmem [shape: f32[16,64], index: 2, kind: input, shape index: {}]
  %s3 = inlined_call_operand.vmem [shape: f32[16,1], index: 3, kind: input, shape index: {}]
  %s4 = inlined_call_operand.vmem [shape: f32[2,16,128], index: 4, kind: output, shape index: {}]
  %s5 = sld [smem:[#allocation0]]
  $region98: #{graphsage_forward.5} parent=0
    _
  %s7 = ssub.s32 1, %s5
  %s8 = scalar_select 0, %s7, %s5
  $region1: #{graphsage_forward.5} parent=0
    #allocation3 [shape = 'u8[65536]{0}', space=vmem, size = 0x10000, scoped, tag = 'input window, operand 0']
    loop: start=0, step=1, limit=6
    $region2: #{graphsage_forward.5} parent=1 // loop_pre_header
      _
    $region3: #{graphsage_forward.5} parent=1 // loop_header
      %s10 = sphi 0, %s14
      %p11 = scmp.ge.s32.totalorder %s10, 6
      %s17 = sphi 0, %s29
      %s18 = sphi 0, %s25
      %s19 = sphi 0, %s17
      %s20 = sphi 0, %s18
      %s21 = sphi 0, %s19
      %s22 = sphi 0, %s20
      %s34 = sphi 0, %s36
      %s37 = sphi 0, %s34
      %s38 = sphi 0, %s37
      %s54 = sphi 0, %s38
      %s58 = sphi 0, %s58
      %s60 = sphi 0, %s58
      %s61 = sphi 0, %s60
      %s75 = sphi 0, %s61
      %s79 = sphi 0, %s79
      %s81 = sphi 0, %s79
      %s82 = sphi 0, %s81
      %s96 = sphi 0, %s82
      %s100 = sphi 0, %s100
      %s102 = sphi 0, %s100
      %s103 = sphi 0, %s102
      %s117 = sphi 0, %s103
      %s123 = sphi 0, %s125
      %s126 = sphi 0, %s123
      %s127 = sphi 0, %s126
      %s143 = sphi 0, %s127
    $region4: #{graphsage_forward.5} parent=1 // loop_header_branch
      %13 = sbr.rel (%p11) target = $region8
    $region5: #{graphsage_forward.5} parent=1 // loop_body
      %s15 = ssub.s32 %s10, 1
      %s16 = ssub.s32 %s10, 2
      %s23 = sadd.s32 1, %s18
      %p24 = scmp.ge.s32.totalorder %s23, 2
      %s25 = scalar_select %p24, 0, %s23
      %s26 = sadd.s32 1, %s17
      %s27 = scalar_select %p24, %s26, %s17
      %p28 = scmp.ge.s32.totalorder %s27, 2
      %s29 = scalar_select %p28, 0, %s27
      %s30 = ssub.s32 %s18, %s25
      %s31 = ssub.s32 %s17, %s29
      %s32 = sor.u32 %s30, %s31
      %p33 = scmp.eq.s32.totalorder %s32, 0
      %s35 = sadd.s32 %s34, 1
      %s36 = scalar_select %p33, %s34, %s35
      %p39 = pneg %p33
      %p40 = scmp.eq.s32.totalorder %s10, 3
      %p41 = por %p39, %p40
      %p42 = scmp.ne.s32.totalorder %s34, %s37
      %p43 = scmp.eq.s32.totalorder %s10, 0
      %p44 = por %p42, %p43
      %p45 = scmp.ne.s32.totalorder %s34, %s37
      %p46 = scmp.eq.s32.totalorder %s15, 3
      %p47 = por %p45, %p46
      %p48 = scmp.ne.s32.totalorder %s37, %s38
      %p49 = scmp.eq.s32.totalorder %s15, 0
      %p50 = por %p48, %p49
      %p51 = scmp.ne.s32.totalorder %s37, %s38
      %p52 = scmp.eq.s32.totalorder %s16, 3
      %p53 = por %p51, %p52
      %p55 = scmp.ne.s32.totalorder %s38, %s54
      %p56 = scmp.eq.s32.totalorder %s16, 0
      %p57 = por %p55, %p56
      %s59 = sadd.s32 %s58, 1
      %p62 = scmp.eq.s32.totalorder %s10, 3
      %p63 = scmp.ne.s32.totalorder %s58, %s60
      %p64 = scmp.eq.s32.totalorder %s10, 0
      %p65 = por %p63, %p64
      %p66 = scmp.ne.s32.totalorder %s58, %s60
      %p67 = scmp.eq.s32.totalorder %s15, 3
      %p68 = por %p66, %p67
      %p69 = scmp.ne.s32.totalorder %s60, %s61
      %p70 = scmp.eq.s32.totalorder %s15, 0
      %p71 = por %p69, %p70
      %p72 = scmp.ne.s32.totalorder %s60, %s61
      %p73 = scmp.eq.s32.totalorder %s16, 3
      %p74 = por %p72, %p73
      %p76 = scmp.ne.s32.totalorder %s61, %s75
      %p77 = scmp.eq.s32.totalorder %s16, 0
      %p78 = por %p76, %p77
      %s80 = sadd.s32 %s79, 1
      %p83 = scmp.eq.s32.totalorder %s10, 3
      %p84 = scmp.ne.s32.totalorder %s79, %s81
      %p85 = scmp.eq.s32.totalorder %s10, 0
      %p86 = por %p84, %p85
      %p87 = scmp.ne.s32.totalorder %s79, %s81
      %p88 = scmp.eq.s32.totalorder %s15, 3
      %p89 = por %p87, %p88
      %p90 = scmp.ne.s32.totalorder %s81, %s82
      %p91 = scmp.eq.s32.totalorder %s15, 0
      %p92 = por %p90, %p91
      %p93 = scmp.ne.s32.totalorder %s81, %s82
      %p94 = scmp.eq.s32.totalorder %s16, 3
      %p95 = por %p93, %p94
      %p97 = scmp.ne.s32.totalorder %s82, %s96
      %p98 = scmp.eq.s32.totalorder %s16, 0
      %p99 = por %p97, %p98
      %s101 = sadd.s32 %s100, 1
      %p104 = scmp.eq.s32.totalorder %s10, 3
      %p105 = scmp.ne.s32.totalorder %s100, %s102
      %p106 = scmp.eq.s32.totalorder %s10, 0
      %p107 = por %p105, %p106
      %p108 = scmp.ne.s32.totalorder %s100, %s102
      %p109 = scmp.eq.s32.totalorder %s15, 3
      %p110 = por %p108, %p109
      %p111 = scmp.ne.s32.totalorder %s102, %s103
      %p112 = scmp.eq.s32.totalorder %s15, 0
      %p113 = por %p111, %p112
      %p114 = scmp.ne.s32.totalorder %s102, %s103
      %p115 = scmp.eq.s32.totalorder %s16, 3
      %p116 = por %p114, %p115
      %p118 = scmp.ne.s32.totalorder %s103, %s117
      %p119 = scmp.eq.s32.totalorder %s16, 0
      %p120 = por %p118, %p119
      %s121 = ssub.s32 %s17, %s29
      %p122 = scmp.eq.s32.totalorder %s121, 0
      %s124 = sadd.s32 %s123, 1
      %s125 = scalar_select %p122, %s123, %s124
      %p128 = pneg %p122
      %p129 = scmp.eq.s32.totalorder %s10, 3
      %p130 = por %p128, %p129
      %p131 = scmp.ne.s32.totalorder %s123, %s126
      %p132 = scmp.eq.s32.totalorder %s10, 0
      %p133 = por %p131, %p132
      %p134 = scmp.ne.s32.totalorder %s123, %s126
      %p135 = scmp.eq.s32.totalorder %s15, 3
      %p136 = por %p134, %p135
      %p137 = scmp.ne.s32.totalorder %s126, %s127
      %p138 = scmp.eq.s32.totalorder %s15, 0
      %p139 = por %p137, %p138
      %p140 = scmp.ne.s32.totalorder %s126, %s127
      %p141 = scmp.eq.s32.totalorder %s16, 3
      %p142 = por %p140, %p141
      %p144 = scmp.ne.s32.totalorder %s127, %s143
      %p145 = scmp.eq.s32.totalorder %s16, 0
      %p146 = por %p144, %p145
      %p147 = scmp.le.s32.totalorder 1, %s10
      %p148 = scmp.lt.s32.totalorder %s10, 5
      %p149 = pnand %p147, %p148
      %p150 = pneg %p149
      // Predicated region
      $region9: #{graphsage_forward.5} parent=5 // pred_check
        _
      $region10: #{graphsage_forward.5} parent=5 // pred_check_branch
        %152 = sbr.rel (%p149) target = $region12
      $region11: #{graphsage_forward.5} parent=5 // pred_region
        %s153 = ssub.s32 %s10, 1
        // Predicated region
        $region13: #{graphsage_forward.5} parent=11 // pred_check
          %p154 = pneg %p71
        $region14: #{graphsage_forward.5} parent=11 // pred_check_branch
          %156 = sbr.rel (%p154) target = $region16
        $region15: #{graphsage_forward.5} parent=11 // pred_region
          _
        $region16: #{graphsage_forward.5} parent=11 // pred_fallthru
          _
        // Predicated region
        $region17: #{graphsage_forward.5} parent=11 // pred_check
          %p157 = pneg %p92
        $region18: #{graphsage_forward.5} parent=11 // pred_check_branch
          %159 = sbr.rel (%p157) target = $region20
        $region19: #{graphsage_forward.5} parent=11 // pred_region
          _
        $region20: #{graphsage_forward.5} parent=11 // pred_fallthru
          _
        // Predicated region
        $region21: #{graphsage_forward.5} parent=11 // pred_check
          %p160 = pneg %p113
        $region22: #{graphsage_forward.5} parent=11 // pred_check_branch
          %162 = sbr.rel (%p160) target = $region24
        $region23: #{graphsage_forward.5} parent=11 // pred_region
          _
        $region24: #{graphsage_forward.5} parent=11 // pred_fallthru
          _
      $region12: #{graphsage_forward.5} parent=5 // pred_fallthru
        _
      %p163 = scmp.lt.s32.totalorder %s10, 4
      // Predicated region
      $region25: #{graphsage_forward.5} parent=5 // pred_check
        %p164 = pneg %p163
      $region26: #{graphsage_forward.5} parent=5 // pred_check_branch
        %166 = sbr.rel (%p164) target = $region28
      $region27: #{graphsage_forward.5} parent=5 // pred_region
        // Predicated region
        $region29: #{graphsage_forward.5} parent=27 // pred_check
          %p167 = pneg %p44
        $region30: #{graphsage_forward.5} parent=27 // pred_check_branch
          %169 = sbr.rel (%p167) target = $region32
        $region31: #{graphsage_forward.5} parent=27 // pred_region
          %s170 = sand.u32 %s34, 1
          %s171 = sand.u32 %s34, 1
          %s172 = smul.addr %s171, 64
          %s173 = scalar_lea.vmem [#allocation3], %s172
          %s174 = smul.u32 16, %s18
          %s175 = smul.addr %s174, 2
          %s176 = sadd.s32 %s17, %s175
          %s177 = smul.addr %s176, 4
          %s178 = scalar_lea.vmem %s0, %s177
          // Predicated region
          $region33: #{graphsage_forward.5} parent=31 // pred_check
            _
          $region34: #{graphsage_forward.5} parent=31 // pred_check_branch
            %180 = sbr.rel (0) target = $region36
          $region35: #{graphsage_forward.5} parent=31 // pred_region
            // Predicated region
            $region37: #{graphsage_forward.5} parent=35 // pred_check
              _
            $region38: #{graphsage_forward.5} parent=35 // pred_check_branch
              %182 = sbr.rel target = $region40
            $region39: #{graphsage_forward.5} parent=35 // pred_region
              // Predicated region
              $region52: #{graphsage_forward.5} parent=39 // pred_check
                _
              $region53: #{graphsage_forward.5} parent=39 // pred_check_branch
                %228 = sbr.rel (0) target = $region55
              $region54: #{graphsage_forward.5} parent=39 // pred_region
                loop: start=0, step=1, limit=1
                $region56: #{graphsage_forward.5} parent=54 // loop_pre_header
                  _
                $region57: #{graphsage_forward.5} parent=54 // loop_header
                  %s230 = sphi 0, %s234
                  %p231 = scmp.ge.s32.totalorder %s230, 1
                  %s235 = sphi %s178, %s178
                  %s236 = sphi %s173, %s173
                $region58: #{graphsage_forward.5} parent=54 // loop_header_branch
                  %233 = sbr.rel (%p231) target = $region62
                $region59: #{graphsage_forward.5} parent=54 // loop_body
                  _
                $region60: #{graphsage_forward.5} parent=54 // loop_footer
                  %s234 = sadd.s32 1, %s230
                $region61: #{graphsage_forward.5} parent=54 // loop_footer_branch
                  %229 = sbr.rel target = $region57
                $region62: #{graphsage_forward.5} parent=54 // loop_exit
                  _
                %s238 = ssub.s32 16, 1
                loop: start=0, step=1, limit=1
                $region63: #{graphsage_forward.5} parent=54 // loop_pre_header
                  _
                $region64: #{graphsage_forward.5} parent=54 // loop_header
                  %s240 = sphi 0, %s244
                  %p241 = scmp.ge.s32.totalorder %s240, 1
                  %s245 = sphi %s178, %s178
                  %s246 = sphi %s173, %s173
                $region65: #{graphsage_forward.5} parent=54 // loop_header_branch
                  %243 = sbr.rel (%p241) target = $region69
                $region66: #{graphsage_forward.5} parent=54 // loop_body
                  %v247 = vld [vmem:[%s245] sm:%s238]
                  %248 = vst [vmem:[%s246] sm:%s238] %v247
                  %v249 = vld [vmem:[%s245 + $0x8] sm:%s238]
                  %250 = vst [vmem:[%s246 + $0x4] sm:%s238] %v249
                  %v251 = vld [vmem:[%s245 + $0x10] sm:%s238]
                  %252 = vst [vmem:[%s246 + $0x8] sm:%s238] %v251
                  %v253 = vld [vmem:[%s245 + $0x18] sm:%s238]
                  %254 = vst [vmem:[%s246 + $0xc] sm:%s238] %v253
                  %v255 = vld [vmem:[%s245 + $0x20] sm:%s238]
                  %256 = vst [vmem:[%s246 + $0x10] sm:%s238] %v255
                  %v257 = vld [vmem:[%s245 + $0x28] sm:%s238]
                  %258 = vst [vmem:[%s246 + $0x14] sm:%s238] %v257
                  %v259 = vld [vmem:[%s245 + $0x30] sm:%s238]
                  %260 = vst [vmem:[%s246 + $0x18] sm:%s238] %v259
                  %v261 = vld [vmem:[%s245 + $0x38] sm:%s238]
                  %262 = vst [vmem:[%s246 + $0x1c] sm:%s238] %v261
                  %v263 = vld [vmem:[%s245 + $0x40] sm:%s238]
                  %264 = vst [vmem:[%s246 + $0x20] sm:%s238] %v263
                  %v265 = vld [vmem:[%s245 + $0x48] sm:%s238]
                  %266 = vst [vmem:[%s246 + $0x24] sm:%s238] %v265
                  %v267 = vld [vmem:[%s245 + $0x50] sm:%s238]
                  %268 = vst [vmem:[%s246 + $0x28] sm:%s238] %v267
                  %v269 = vld [vmem:[%s245 + $0x58] sm:%s238]
                  %270 = vst [vmem:[%s246 + $0x2c] sm:%s238] %v269
                  %v271 = vld [vmem:[%s245 + $0x60] sm:%s238]
                  %272 = vst [vmem:[%s246 + $0x30] sm:%s238] %v271
                  %v273 = vld [vmem:[%s245 + $0x68] sm:%s238]
                  %274 = vst [vmem:[%s246 + $0x34] sm:%s238] %v273
                  %v275 = vld [vmem:[%s245 + $0x70] sm:%s238]
                  %276 = vst [vmem:[%s246 + $0x38] sm:%s238] %v275
                  %v277 = vld [vmem:[%s245 + $0x78] sm:%s238]
                  %278 = vst [vmem:[%s246 + $0x3c] sm:%s238] %v277
                $region67: #{graphsage_forward.5} parent=54 // loop_footer
                  %s244 = sadd.s32 1, %s240
                $region68: #{graphsage_forward.5} parent=54 // loop_footer_branch
                  %239 = sbr.rel target = $region64
                $region69: #{graphsage_forward.5} parent=54 // loop_exit
                  _
              $region55: #{graphsage_forward.5} parent=39 // pred_fallthru
                _
            $region40: #{graphsage_forward.5} parent=35 // pred_fallthru
              _
            // Predicated region
            $region41: #{graphsage_forward.5} parent=35 // pred_check
              _
            $region42: #{graphsage_forward.5} parent=35 // pred_check_branch
              %184 = sbr.rel (0) target = $region44
            $region43: #{graphsage_forward.5} parent=35 // pred_region
              %s186 = ssub.s32 16, 1
              loop: start=0, step=1, limit=1
              $region45: #{graphsage_forward.5} parent=43 // loop_pre_header
                _
              $region46: #{graphsage_forward.5} parent=43 // loop_header
                %s188 = sphi 0, %s192
                %p189 = scmp.ge.s32.totalorder %s188, 1
                %s193 = sphi %s178, %s178
                %s194 = sphi %s173, %s173
              $region47: #{graphsage_forward.5} parent=43 // loop_header_branch
                %191 = sbr.rel (%p189) target = $region51
              $region48: #{graphsage_forward.5} parent=43 // loop_body
                %v195 = vld [vmem:[%s193] sm:%s186]
                %196 = vst [vmem:[%s194] sm:%s186] %v195
                %v197 = vld [vmem:[%s193 + $0x8] sm:%s186]
                %198 = vst [vmem:[%s194 + $0x4] sm:%s186] %v197
                %v199 = vld [vmem:[%s193 + $0x10] sm:%s186]
                %200 = vst [vmem:[%s194 + $0x8] sm:%s186] %v199
                %v201 = vld [vmem:[%s193 + $0x18] sm:%s186]
                %202 = vst [vmem:[%s194 + $0xc] sm:%s186] %v201
                %v203 = vld [vmem:[%s193 + $0x20] sm:%s186]
                %204 = vst [vmem:[%s194 + $0x10] sm:%s186] %v203
                %v205 = vld [vmem:[%s193 + $0x28] sm:%s186]
                %206 = vst [vmem:[%s194 + $0x14] sm:%s186] %v205
                %v207 = vld [vmem:[%s193 + $0x30] sm:%s186]
                %208 = vst [vmem:[%s194 + $0x18] sm:%s186] %v207
                %v209 = vld [vmem:[%s193 + $0x38] sm:%s186]
                %210 = vst [vmem:[%s194 + $0x1c] sm:%s186] %v209
                %v211 = vld [vmem:[%s193 + $0x40] sm:%s186]
                %212 = vst [vmem:[%s194 + $0x20] sm:%s186] %v211
                %v213 = vld [vmem:[%s193 + $0x48] sm:%s186]
                %214 = vst [vmem:[%s194 + $0x24] sm:%s186] %v213
                %v215 = vld [vmem:[%s193 + $0x50] sm:%s186]
                %216 = vst [vmem:[%s194 + $0x28] sm:%s186] %v215
                %v217 = vld [vmem:[%s193 + $0x58] sm:%s186]
                %218 = vst [vmem:[%s194 + $0x2c] sm:%s186] %v217
                %v219 = vld [vmem:[%s193 + $0x60] sm:%s186]
                %220 = vst [vmem:[%s194 + $0x30] sm:%s186] %v219
                %v221 = vld [vmem:[%s193 + $0x68] sm:%s186]
                %222 = vst [vmem:[%s194 + $0x34] sm:%s186] %v221
                %v223 = vld [vmem:[%s193 + $0x70] sm:%s186]
                %224 = vst [vmem:[%s194 + $0x38] sm:%s186] %v223
                %v225 = vld [vmem:[%s193 + $0x78] sm:%s186]
                %226 = vst [vmem:[%s194 + $0x3c] sm:%s186] %v225
              $region49: #{graphsage_forward.5} parent=43 // loop_footer
                %s192 = sadd.s32 1, %s188
              $region50: #{graphsage_forward.5} parent=43 // loop_footer_branch
                %187 = sbr.rel target = $region46
              $region51: #{graphsage_forward.5} parent=43 // loop_exit
                _
            $region44: #{graphsage_forward.5} parent=35 // pred_fallthru
              _
          $region36: #{graphsage_forward.5} parent=31 // pred_fallthru
            _
          %279 = vnop
        $region32: #{graphsage_forward.5} parent=27 // pred_fallthru
          _
      $region28: #{graphsage_forward.5} parent=5 // pred_fallthru
        _
      %p280 = scmp.le.s32.totalorder 1, %s10
      %p281 = scmp.lt.s32.totalorder %s10, 5
      %p282 = pnand %p280, %p281
      %p283 = pneg %p282
      // Predicated region
      $region70: #{graphsage_forward.5} parent=5 // pred_check
        _
      $region71: #{graphsage_forward.5} parent=5 // pred_check_branch
        %285 = sbr.rel (%p282) target = $region73
      $region72: #{graphsage_forward.5} parent=5 // pred_region
        %s286 = ssub.s32 %s10, 1
        %s287 = sand.u32 %s37, 1
        %s288 = sand.u32 %s37, 1
        %s289 = smul.addr %s288, 64
        %s290 = scalar_lea.vmem [#allocation3], %s289
        // Predicated region
        $region74: #{graphsage_forward.5} parent=72 // pred_check
          %p291 = pneg %p50
        $region75: #{graphsage_forward.5} parent=72 // pred_check_branch
          %293 = sbr.rel (%p291) target = $region77
        $region76: #{graphsage_forward.5} parent=72 // pred_region
          _
        $region77: #{graphsage_forward.5} parent=72 // pred_fallthru
          _
        %s294 = sand.u32 %s37, 1
        %s295 = sand.u32 %s37, 1
        %s296 = smul.addr %s295, 64
        %s297 = scalar_lea.vmem [#allocation3], %s296
        %p298 = pneg %p50
        %p299 = pneg %p47
        %p300 = pneg %p71
        %p301 = pneg %p68
        %p302 = pneg %p92
        %p303 = pneg %p89
        %p304 = pneg %p113
        %p305 = pneg %p110
        %p306 = pneg %p139
        %p307 = pneg %p136
        %p308 = scmp.lt.s32.totalorder %s19, 1
        %s309 = scalar_select %p308, %s19, 1
        %s310 = smul.addr %s309, 2
        %s311 = smul.addr %s310, 8
        %s312 = scalar_lea.vmem %s4, %s311
        %s313 = smul.u32 16, %s20
        %p314 = scmp.lt.s32.totalorder %s19, 1
        %s315 = scalar_select %p314, %s19, 1
        %s316 = smul.addr %s315, 2
        %s317 = smul.addr %s316, 8
        %s318 = scalar_lea.vmem %s4, %s317
        %p320 = scmp.eq.s32.totalorder %s20, 0
        // Predicated region
        $region78: #{graphsage_forward.5} parent=72 // pred_check
          %p321 = pneg %p320
        $region79: #{graphsage_forward.5} parent=72 // pred_check_branch
          %323 = sbr.rel (%p321) target = $region81
        $region80: #{graphsage_forward.5} parent=72 // pred_region
          %s324 = smul.u32 %s19, 8
          %s325 = smul.addr %s324, 4
          %s326 = scalar_lea.vmem %s1, %s325
          %v327 = vld [vmem:[%s326] sm:$0xf]
          %v328 = vld [vmem:[%s326 + $0x4] sm:$0xf]
          %v329 = vld [vmem:[%s326 + $0x8] sm:$0xf]
          %v330 = vld [vmem:[%s326 + $0xc] sm:$0xf]
          %v331 = vld [vmem:[%s326 + $0x10] sm:$0xf]
          %v332 = vld [vmem:[%s326 + $0x14] sm:$0xf]
          %v333 = vld [vmem:[%s326 + $0x18] sm:$0xf]
          %v334 = vld [vmem:[%s326 + $0x1c] sm:$0xf]
          %v335 = vunpack.c.l.bf16 %v327
          %v336 = vunpack.c.l.bf16 %v328
          %v337 = vunpack.c.l.bf16 %v329
          %v338 = vunpack.c.l.bf16 %v330
          %v339 = vunpack.c.l.bf16 %v331
          %v340 = vunpack.c.l.bf16 %v332
          %v341 = vunpack.c.l.bf16 %v333
          %v342 = vunpack.c.l.bf16 %v334
          %343 = vst [vmem:[#allocation2] sm:$0xff] %v335
          %344 = vst [vmem:[#allocation2 + $0x8] sm:$0xff] %v336
          %345 = vst [vmem:[#allocation2 + $0x10] sm:$0xff] %v337
          %346 = vst [vmem:[#allocation2 + $0x18] sm:$0xff] %v338
          %347 = vst [vmem:[#allocation2 + $0x20] sm:$0xff] %v339
          %348 = vst [vmem:[#allocation2 + $0x28] sm:$0xff] %v340
          %349 = vst [vmem:[#allocation2 + $0x30] sm:$0xff] %v341
          %350 = vst [vmem:[#allocation2 + $0x38] sm:$0xff] %v342
        $region81: #{graphsage_forward.5} parent=72 // pred_fallthru
          _
        %v351 = vld [vmem:[#allocation2] sm:$0xff]
        %v352 = vld [vmem:[#allocation2 + $0x8] sm:$0xff]
        %v353 = vld [vmem:[#allocation2 + $0x10] sm:$0xff]
        %v354 = vld [vmem:[#allocation2 + $0x18] sm:$0xff]
        %v355 = vld [vmem:[#allocation2 + $0x20] sm:$0xff]
        %v356 = vld [vmem:[#allocation2 + $0x28] sm:$0xff]
        %v357 = vld [vmem:[#allocation2 + $0x30] sm:$0xff]
        %v358 = vld [vmem:[#allocation2 + $0x38] sm:$0xff]
        %s359 = smul.u32 %s20, 8
        %s360 = smul.addr %s359, 4
        %s361 = scalar_lea.vmem %s1, %s360
        %v362 = vld [vmem:[%s361] sm:$0xf]
        %v363 = vld [vmem:[%s361 + $0x4] sm:$0xf]
        %v364 = vld [vmem:[%s361 + $0x8] sm:$0xf]
        %v365 = vld [vmem:[%s361 + $0xc] sm:$0xf]
        %v366 = vld [vmem:[%s361 + $0x10] sm:$0xf]
        %v367 = vld [vmem:[%s361 + $0x14] sm:$0xf]
        %v368 = vld [vmem:[%s361 + $0x18] sm:$0xf]
        %v369 = vld [vmem:[%s361 + $0x1c] sm:$0xf]
        %v370 = vld [vmem:[%s290] sm:$0xf]
        %v371 = vld [vmem:[%s290 + $0x4] sm:$0xf]
        %v372 = vld [vmem:[%s290 + $0x8] sm:$0xf]
        %v373 = vld [vmem:[%s290 + $0xc] sm:$0xf]
        %v374 = vld [vmem:[%s290 + $0x10] sm:$0xf]
        %v375 = vld [vmem:[%s290 + $0x14] sm:$0xf]
        %v376 = vld [vmem:[%s290 + $0x18] sm:$0xf]
        %v377 = vld [vmem:[%s290 + $0x1c] sm:$0xf]
        %v378 = vld [vmem:[%s290 + $0x20] sm:$0xf]
        %v379 = vld [vmem:[%s290 + $0x24] sm:$0xf]
        %v380 = vld [vmem:[%s290 + $0x28] sm:$0xf]
        %v381 = vld [vmem:[%s290 + $0x2c] sm:$0xf]
        %v382 = vld [vmem:[%s290 + $0x30] sm:$0xf]
        %v383 = vld [vmem:[%s290 + $0x34] sm:$0xf]
        %v384 = vld [vmem:[%s290 + $0x38] sm:$0xf]
        %v385 = vld [vmem:[%s290 + $0x3c] sm:$0xf]
        %v394 = vunpack.c.l.b16 %v362
        %v395 = vunpack.c.l.b16 %v363
        %v396 = vunpack.c.l.b16 %v364
        %v397 = vunpack.c.l.b16 %v365
        %v398 = vunpack.c.l.b16 %v366
        %v399 = vunpack.c.l.b16 %v367
        %v400 = vunpack.c.l.b16 %v368
        %v401 = vunpack.c.l.b16 %v369
        %v402 = vpack.c.b16 %v395, %v394
        %v403 = vpack.c.b16 %v397, %v396
        %v404 = vpack.c.b16 %v399, %v398
        %v405 = vpack.c.b16 %v401, %v400
        %v426 = vunpack.c.l.b16 %v370
        %v427 = vunpack.c.l.b16 %v371
        %v428 = vunpack.c.l.b16 %v372
        %v429 = vunpack.c.l.b16 %v373
        %v430 = vunpack.c.l.b16 %v374
        %v431 = vunpack.c.l.b16 %v375
        %v432 = vunpack.c.l.b16 %v376
        %v433 = vunpack.c.l.b16 %v377
        %v434 = vunpack.c.l.b16 %v378
        %v435 = vunpack.c.l.b16 %v379
        %v436 = vunpack.c.l.b16 %v380
        %v437 = vunpack.c.l.b16 %v381
        %v438 = vunpack.c.l.b16 %v382
        %v439 = vunpack.c.l.b16 %v383
        %v440 = vunpack.c.l.b16 %v384
        %v441 = vunpack.c.l.b16 %v385
        %v442 = vpack.c.b16 %v427, %v426
        %v443 = vpack.c.b16 %v429, %v428
        %v444 = vpack.c.b16 %v431, %v430
        %v445 = vpack.c.b16 %v433, %v432
        %v446 = vpack.c.b16 %v435, %v434
        %v447 = vpack.c.b16 %v437, %v436
        %v448 = vpack.c.b16 %v439, %v438
        %v449 = vpack.c.b16 %v441, %v440
        %458 = vmatprep.subr.bf16.mxu0 0
        %459 = vmatpush1.bf16.msra.mxu0 %v449
        %460 = vmatprep.subr.bf16.mxu0 0
        %461 = vmatpush1.bf16.msra.mxu0 %v448
        %462 = vmatprep.subr.bf16.mxu0 0
        %463 = vmatpush1.bf16.msra.mxu0 %v447
        %464 = vmatprep.subr.bf16.mxu0 0
        %465 = vmatpush1.bf16.msra.mxu0 %v446
        %466 = vmatprep.subr.bf16.mxu0 0
        %467 = vmatpush1.bf16.msra.mxu0 %v445
        %468 = vmatprep.subr.bf16.mxu0 0
        %469 = vmatpush1.bf16.msra.mxu0 %v444
        %470 = vmatprep.subr.bf16.mxu0 0
        %471 = vmatpush1.bf16.msra.mxu0 %v443
        %472 = vmatprep.subr.bf16.mxu0 0
        %473 = vmatpush1.bf16.msra.mxu0 %v442
        %474 = vmatprep.subr.bf16.mxu0 0
        %475 = vmatpush2.bf16.msra.mxu0 0
        %476 = vmatprep.subr.bf16.mxu0 0
        %477 = vmatpush2.bf16.msra.mxu0 0
        %478 = vmatprep.subr.bf16.mxu0 0
        %479 = vmatpush2.bf16.msra.mxu0 0
        %480 = vmatprep.subr.bf16.mxu0 0
        %481 = vmatpush2.bf16.msra.mxu0 0
        %482 = vmatprep.subr.bf16.mxu0 0
        %483 = vmatpush2.bf16.msra.mxu0 0
        %484 = vmatprep.subr.bf16.mxu0 0
        %485 = vmatpush2.bf16.msra.mxu0 0
        %486 = vmatprep.subr.bf16.mxu0 0
        %487 = vmatpush2.bf16.msra.mxu0 0
        %488 = vmatprep.subr.bf16.mxu0 0
        %489 = vmatpush2.bf16.msra.mxu0 0
        %490 = vmatprep.mubr.bf16.mxu0 0
        %491 = vmatmul.mubr.bf16.gmra.mxu0 %v402
        %v492 = vpop.f32.mrf.mxu0
        %v493 = vadd.f32 0.0, %v492
        %v494 = vpop.f32.mrf.mxu0
        %v495 = vpop.f32.mrf.mxu0
        %v496 = vadd.f32 0.0, %v495
        %v497 = vpop.f32.mrf.mxu0
        %498 = vmatprep.mubr.bf16.mxu0 0
        %499 = vmatmul.mubr.bf16.gmra.mxu0 %v403
        %v500 = vpop.f32.mrf.mxu0
        %v501 = vadd.f32 0.0, %v500
        %v502 = vpop.f32.mrf.mxu0
        %v503 = vpop.f32.mrf.mxu0
        %v504 = vadd.f32 0.0, %v503
        %v505 = vpop.f32.mrf.mxu0
        %506 = vmatprep.mubr.bf16.mxu0 0
        %507 = vmatmul.mubr.bf16.gmra.mxu0 %v404
        %v508 = vpop.f32.mrf.mxu0
        %v509 = vadd.f32 0.0, %v508
        %v510 = vpop.f32.mrf.mxu0
        %v511 = vpop.f32.mrf.mxu0
        %v512 = vadd.f32 0.0, %v511
        %v513 = vpop.f32.mrf.mxu0
        %514 = vmatprep.mubr.bf16.mxu0 0
        %515 = vmatmul.mubr.bf16.gmra.mxu0 %v405
        %v516 = vpop.f32.mrf.mxu0
        %v517 = vadd.f32 0.0, %v516
        %v518 = vpop.f32.mrf.mxu0
        %v519 = vpop.f32.mrf.mxu0
        %v520 = vadd.f32 0.0, %v519
        %v521 = vpop.f32.mrf.mxu0
        %522 = vdwg.mxu0
        %v523 = vadd.f32 %v351, %v493
        %v524 = vadd.f32 %v352, %v496
        %v525 = vadd.f32 %v353, %v501
        %v526 = vadd.f32 %v354, %v504
        %v527 = vadd.f32 %v355, %v509
        %v528 = vadd.f32 %v356, %v512
        %v529 = vadd.f32 %v357, %v517
        %v530 = vadd.f32 %v358, %v520
        %531 = vst [vmem:[#allocation2] sm:$0xff] %v523
        %532 = vst [vmem:[#allocation2 + $0x8] sm:$0xff] %v524
        %533 = vst [vmem:[#allocation2 + $0x10] sm:$0xff] %v525
        %534 = vst [vmem:[#allocation2 + $0x18] sm:$0xff] %v526
        %535 = vst [vmem:[#allocation2 + $0x20] sm:$0xff] %v527
        %536 = vst [vmem:[#allocation2 + $0x28] sm:$0xff] %v528
        %537 = vst [vmem:[#allocation2 + $0x30] sm:$0xff] %v529
        %538 = vst [vmem:[#allocation2 + $0x38] sm:$0xff] %v530
        %p539 = scmp.eq.s32.totalorder %s20, 1
        // Predicated region
        $region82: #{graphsage_forward.5} parent=72 // pred_check
          %p540 = pneg %p539
        $region83: #{graphsage_forward.5} parent=72 // pred_check_branch
          %542 = sbr.rel (%p540) target = $region85
        $region84: #{graphsage_forward.5} parent=72 // pred_region
          %v543 = vld [vmem:[%s2] sm:$0xff]
          %v544 = vld [vmem:[%s2 + $0x8] sm:$0xff]
          %v545 = vld [vmem:[#allocation2] sm:$0xff]
          %v546 = vld [vmem:[#allocation2 + $0x8] sm:$0xff]
          %v547 = vld [vmem:[#allocation2 + $0x10] sm:$0xff]
          %v548 = vld [vmem:[#allocation2 + $0x18] sm:$0xff]
          %v549 = vld [vmem:[#allocation2 + $0x20] sm:$0xff]
          %v550 = vld [vmem:[#allocation2 + $0x28] sm:$0xff]
          %v551 = vld [vmem:[#allocation2 + $0x30] sm:$0xff]
          %v552 = vld [vmem:[#allocation2 + $0x38] sm:$0xff]
          %v553 = vld [vmem:[%s3] sm:$0xff]
          %v554 = vld [vmem:[%s3 + $0x8] sm:$0xff]
          %556 = vset.pattern.permute.xlu0 0
          %557 = vperm.xlu0 %556, %v553
          %v558 = vpop.permute.xlu0 %557
          %561 = vset.pattern.permute.xlu0 0
          %562 = vperm.xlu0 %561, %v554
          %v563 = vpop.permute.xlu0 %562
          %vm565 = vcmask 523264
          %v567 = vsel %vm565, %v543, 0
          %v570 = vsel %vm565, %v544, 0
          %572 = vmatprep.subr.mxu0 0.0
          %573 = vmatpush1.msra.mxu0 0.0
          %574 = vmatprep.subr.mxu0 0.0
          %575 = vmatpush1.msra.mxu0 0.0
          %576 = vmatprep.subr.mxu0 0.0
          %577 = vmatpush1.msra.mxu0 0.0
          %578 = vmatprep.subr.mxu0 0.0
          %579 = vmatpush1.msra.mxu0 0.0
          %580 = vmatprep.subr.mxu0 0.0
          %581 = vmatpush1.msra.mxu0 0.0
          %582 = vmatprep.subr.mxu0 0.0
          %583 = vmatpush1.msra.mxu0 0.0
          %584 = vmatprep.subr.mxu0 0.0
          %585 = vmatpush1.msra.mxu0 0.0
          %586 = vmatprep.subr.mxu0 0.0
          %587 = vmatpush1.msra.mxu0 0.0
          %588 = vmatprep.subr.mxu0 0.0
          %589 = vmatpush1.msra.mxu0 %v552
          %590 = vmatprep.subr.mxu0 0.0
          %591 = vmatpush1.msra.mxu0 %v551
          %592 = vmatprep.subr.mxu0 0.0
          %593 = vmatpush1.msra.mxu0 %v550
          %594 = vmatprep.subr.mxu0 0.0
          %595 = vmatpush1.msra.mxu0 %v549
          %596 = vmatprep.subr.mxu0 0.0
          %597 = vmatpush1.msra.mxu0 %v548
          %598 = vmatprep.subr.mxu0 0.0
          %599 = vmatpush1.msra.mxu0 %v547
          %600 = vmatprep.subr.mxu0 0.0
          %601 = vmatpush1.msra.mxu0 %v546
          %602 = vmatprep.subr.mxu0 0.0
          %603 = vmatpush1.msra.mxu0 %v545
          %604 = vmatprep.subr.mxu0 0.0
          %605 = vmatpush2.msra.mxu0 0.0
          %606 = vmatprep.subr.mxu0 0.0
          %607 = vmatpush2.msra.mxu0 0.0
          %608 = vmatprep.subr.mxu0 0.0
          %609 = vmatpush2.msra.mxu0 0.0
          %610 = vmatprep.subr.mxu0 0.0
          %611 = vmatpush2.msra.mxu0 0.0
          %612 = vmatprep.subr.mxu0 0.0
          %613 = vmatpush2.msra.mxu0 0.0
          %614 = vmatprep.subr.mxu0 0.0
          %615 = vmatpush2.msra.mxu0 0.0
          %616 = vmatprep.subr.mxu0 0.0
          %617 = vmatpush2.msra.mxu0 0.0
          %618 = vmatprep.subr.mxu0 0.0
          %619 = vmatpush2.msra.mxu0 0.0
          %620 = vmatprep.subr.mxu0 0.0
          %621 = vmatpush2.msra.mxu0 0.0
          %622 = vmatprep.subr.mxu0 0.0
          %623 = vmatpush2.msra.mxu0 0.0
          %624 = vmatprep.subr.mxu0 0.0
          %625 = vmatpush2.msra.mxu0 0.0
          %626 = vmatprep.subr.mxu0 0.0
          %627 = vmatpush2.msra.mxu0 0.0
          %628 = vmatprep.subr.mxu0 0.0
          %629 = vmatpush2.msra.mxu0 0.0
          %630 = vmatprep.subr.mxu0 0.0
          %631 = vmatpush2.msra.mxu0 0.0
          %632 = vmatprep.subr.mxu0 0.0
          %633 = vmatpush2.msra.mxu0 0.0
          %634 = vmatprep.subr.mxu0 0.0
          %635 = vmatpush2.msra.mxu0 0.0
          %636 = vmatprep.mubr.f32.mxu0 0.0
          %637 = vmatmul.mubr.f32.gmra.mxu0 %v567
          %v638 = vpop.f32.mrf.mxu0
          %v639 = vadd.f32 %v558, %v638
          %v640 = vpop.f32.mrf.mxu0
          %641 = vmatprep.mubr.f32.mxu0 0.0
          %642 = vmatmul.mubr.f32.gmra.mxu0 %v570
          %v643 = vpop.f32.mrf.mxu0
          %v644 = vadd.f32 %v563, %v643
          %v645 = vpop.f32.mrf.mxu0
          %646 = vdwg.mxu0
          %647 = vst [vmem:[%s318] sm:$0xff] %v639
          %648 = vst [vmem:[%s318 + $0x8] sm:$0xff] %v644
        $region85: #{graphsage_forward.5} parent=72 // pred_fallthru
          _
        %p649 = scmp.lt.s32.totalorder %s19, 1
        %s650 = scalar_select %p649, %s19, 1
        %s651 = smul.addr %s650, 2
        %s652 = smul.addr %s651, 8
        %s653 = scalar_lea.vmem %s4, %s652
        // Predicated region
        $region86: #{graphsage_forward.5} parent=72 // pred_check
          %p654 = pneg %p136
        $region87: #{graphsage_forward.5} parent=72 // pred_check_branch
          %656 = sbr.rel (%p654) target = $region89
        $region88: #{graphsage_forward.5} parent=72 // pred_region
          _
        $region89: #{graphsage_forward.5} parent=72 // pred_fallthru
          _
      $region73: #{graphsage_forward.5} parent=5 // pred_fallthru
        _
      %p657 = scmp.le.s32.totalorder 2, %s10
      // Predicated region
      $region90: #{graphsage_forward.5} parent=5 // pred_check
        %p658 = pneg %p657
      $region91: #{graphsage_forward.5} parent=5 // pred_check_branch
        %660 = sbr.rel (%p658) target = $region93
      $region92: #{graphsage_forward.5} parent=5 // pred_region
        %s661 = ssub.s32 %s10, 2
        // Predicated region
        $region94: #{graphsage_forward.5} parent=92 // pred_check
          %p662 = pneg %p142
        $region95: #{graphsage_forward.5} parent=92 // pred_check_branch
          %664 = sbr.rel (%p662) target = $region97
        $region96: #{graphsage_forward.5} parent=92 // pred_region
          %p665 = scmp.lt.s32.totalorder %s21, 1
          %s666 = scalar_select %p665, %s21, 1
          %s667 = smul.addr %s666, 2
          %s668 = smul.addr %s667, 8
          %s669 = scalar_lea.vmem %s4, %s668
        $region97: #{graphsage_forward.5} parent=92 // pred_fallthru
          _
      $region93: #{graphsage_forward.5} parent=5 // pred_fallthru
        _
    $region6: #{graphsage_forward.5} parent=1 // loop_footer
      %s14 = sadd.s32 1, %s10
    $region7: #{graphsage_forward.5} parent=1 // loop_footer_branch
      %9 = sbr.rel target = $region3
    $region8: #{graphsage_forward.5} parent=1 // loop_exit
      _

</llo_original>
